<compile_context>
chip_gen: v6e
topology: v6e:2x2x1
jax: 0.10.0
libtpu: 0.0.40
codegen_flags: <defaults>
</compile_context>

<pallas_src>
import math
import functools

import jax
import jax.numpy as jnp
from jax.experimental import pallas as pl
from jax.experimental.pallas import tpu as pltpu


def _bern_kernel(coef_ref, lap_ref, x_ref, y_ref, cs_ref, *, k, tf):
    """coef_ref: SMEM (k+1,) f32 = relu(w) * C(k,i)/2^k.
    lap_ref: VMEM (Np, Np) Laplacian (bf16 by default, f32 optional).
    x_ref / y_ref: VMEM (Np, TF) feature tile.
    cs_ref: VMEM (Np, 2*TF) f32 scratch holding [cur | s] for the fused matmul."""
    x = x_ref[...].astype(jnp.float32)
    if k == 0:
        y_ref[...] = (coef_ref[0] * x).astype(y_ref.dtype)
        return

    lap = lap_ref[...]
    cdt = lap.dtype                         # MXU input dtype (bf16 or f32)
    lo = pl.ds(0, tf)
    hi = pl.ds(tf, tf)

    # Seed: cur = poly_0 = x ;  s = coef[k] * poly_0   (laid out contiguously)
    cs_ref[:, lo] = x
    cs_ref[:, hi] = coef_ref[k] * x

    for step in range(1, k + 1):            # k is static -> unrolled at trace time
        cs = cs_ref[...]                    # f32 state [cur | s]
        # One fused MXU launch: prod = L @ [cur | s]  (f32 accumulation)
        prod = jnp.dot(lap, cs.astype(cdt), preferred_element_type=jnp.float32)
        # poly_step = (2I - L) @ poly_{step-1}  (2I - L never materialized)
        cur = 2.0 * cs[:, :tf] - prod[:, :tf]
        # Horner: s <- L @ s + coef[k-step] * poly_step
        s = prod[:, tf:] + coef_ref[k - step] * cur
        if step < k:
            cs_ref[:, lo] = cur
            cs_ref[:, hi] = s
        else:
            y_ref[...] = s.astype(y_ref.dtype)


def _ceil_to(v, m):
    return ((v + m - 1) // m) * m


def bern_conv(x, laplacian, filter_param, k, *, compute_dtype=jnp.bfloat16):
    """Bernstein graph convolution.  compute_dtype controls the MXU input dtype
    for L / cur / s (accumulation is always f32).  Default bf16 (MXU-native on
    all TPU generations); pass jnp.float32 for exactness."""
    n, f = x.shape

    # Host-side glue: fold relu + binomial coefficients into one scalar vector.
    binom = jnp.array([math.comb(k, i) / (2.0 ** k) for i in range(k + 1)],
                      dtype=jnp.float32)
    coef = jax.nn.relu(filter_param.astype(jnp.float32)) * binom

    # Node dim: pad to a multiple of 256 (full MXU width on v6e/v7x; exact).
    n_pad = _ceil_to(max(n, 1), 256)

    # Feature dim: lane-dense (multiple of 128), tf <= 512, and >= 2 grid steps
    # so both v7x TensorCores get work.  The fused matmul makes the RHS 2*tf wide,
    # so even tf=128 keeps the MXU full.
    f128 = _ceil_to(max(f, 1), 128)
    if f128 <= 128:
        tf, f_pad = 128, 256
    else:
        tf = min(512, max(128, (f128 // 2) // 128 * 128))
        f_pad = _ceil_to(f128, tf)
    grid_steps = f_pad // tf

    x_p = jnp.pad(x.astype(jnp.float32), ((0, n_pad - n), (0, f_pad - f)))
    lap_p = jnp.pad(laplacian.astype(jnp.float32),
                    ((0, n_pad - n), (0, n_pad - n))).astype(compute_dtype)

    # VMEM budget: L (double-buffered by the pipeline), cur|s scratch (2*tf wide),
    # double-buffered x/y tiles, plus slack -- capped by the chip's capacity
    # (v7x has 64 MiB per TensorCore; never request more than physical).
    lap_item = jnp.dtype(compute_dtype).itemsize
    lap_bytes = n_pad * n_pad * lap_item
    tile_bytes = n_pad * tf * 4
    want = 2 * lap_bytes + 2 * tile_bytes + 4 * tile_bytes + (2 << 20)
    try:
        vmem_cap = int(pltpu.get_tpu_info().vmem_capacity_bytes)
    except Exception:
        vmem_cap = 64 << 20  # conservative (v7x per-TensorCore) fallback
    vmem_limit = int(min(max(32 << 20, want), int(0.9 * vmem_cap)))
    # TODO(synk): for N large enough that L no longer fits resident, stream L in
    # K-row tiles from HBM (memory_space=pl.ANY + pltpu.emit_pipeline) instead.

    # Advisory cost hint: k fused matmuls of (Np,Np)@(Np,2*tf) per feature tile.
    flops = 4 * k * (n_pad ** 2) * f_pad
    bytes_accessed = lap_bytes + 2 * n_pad * f_pad * 4
    cost = pl.CostEstimate(flops=int(flops), transcendentals=0,
                           bytes_accessed=int(bytes_accessed))

    kernel = functools.partial(_bern_kernel, k=k, tf=tf)
    y_p = pl.pallas_call(
        kernel,
        out_shape=jax.ShapeDtypeStruct((n_pad, f_pad), jnp.float32),
        grid=(grid_steps,),
        in_specs=[
            pl.BlockSpec(memory_space=pltpu.MemorySpace.SMEM),   # coef (k+1,)
            pl.BlockSpec((n_pad, n_pad), lambda j: (0, 0)),      # L, stays resident
            pl.BlockSpec((n_pad, tf), lambda j: (0, j)),         # x feature tile
        ],
        out_specs=pl.BlockSpec((n_pad, tf), lambda j: (0, j)),
        scratch_shapes=[pltpu.VMEM((n_pad, 2 * tf), jnp.float32)],  # [cur | s]
        compiler_params=pltpu.CompilerParams(
            dimension_semantics=("parallel",),
            vmem_limit_bytes=vmem_limit),
        cost_estimate=cost,
    )(coef, lap_p, x_p)
    return y_p[:n, :f]


def bern_conv_ref(x, laplacian, filter_param, k):
    """Pure-JAX reference mirroring the PyTorch forward (f32)."""
    n = laplacian.shape[0]
    p1 = 2.0 * jnp.eye(n, dtype=jnp.float32) - laplacian
    w = jax.nn.relu(filter_param)
    polys = [x]
    cur = x
    for _ in range(k):
        cur = p1 @ cur
        polys.append(cur)
    y = jnp.zeros_like(x)
    for i in range(k + 1):
        t = polys[k - i]
        for _ in range(i):
            t = laplacian @ t
        y = y + w[i] * (math.comb(k, i) / 2.0 ** k) * t
    return y


if __name__ == "__main__":
    key = jax.random.PRNGKey(0)
    k = 3           # polynomial order (k+1 filter params)
    n, f = 64, 32   # num_nodes, feature dim

    k1, k2, k3 = jax.random.split(key, 3)

    # Symmetric normalized Laplacian of a random dense graph: I - D^-1/2 A D^-1/2
    a = jax.random.uniform(k1, (n, n), dtype=jnp.float32)
    a = 0.5 * (a + a.T)
    d_inv_sqrt = 1.0 / jnp.sqrt(jnp.sum(a, axis=1))
    lap = jnp.eye(n, dtype=jnp.float32) - d_inv_sqrt[:, None] * a * d_inv_sqrt[None, :]

    x = jax.random.normal(k2, (n, f), dtype=jnp.float32)

    # reset_parameters() fills with 1.0; perturb (incl. one negative entry) so the
    # relu and the non-trivial polynomial mix are actually exercised.
    filter_param = 1.0 + 0.5 * jax.random.normal(k3, (k + 1,), dtype=jnp.float32)
    filter_param = filter_param.at[1].set(-0.3)

    y_ref = bern_conv_ref(x, lap, filter_param, k)

    # Exact path (f32 L): tight check.
    y_f32 = bern_conv(x, lap, filter_param, k, compute_dtype=jnp.float32)
    jax.block_until_ready(y_f32)
    assert y_f32.shape == (n, f) and y_f32.dtype == jnp.float32
    assert jnp.allclose(y_f32, y_ref, rtol=1e-3, atol=1e-3), "f32 mismatch vs reference"

    # Default fast path (bf16 L, f32 accumulation): loose bf16-level check.
    y_bf = bern_conv(x, lap, filter_param, k)
    jax.block_until_ready(y_bf)
    assert y_bf.shape == (n, f) and y_bf.dtype == jnp.float32
    err = float(jnp.max(jnp.abs(y_bf - y_ref)))
    scale = float(jnp.max(jnp.abs(y_ref))) + 1e-6
    assert err <= 1e-1 * scale + 1e-2, f"bf16 mismatch vs reference (err={err}, scale={scale})"

    print("KERNEL_OK")
</pallas_src>

<mosaic_0001>
module attributes {stable_mosaic.version = 11 : i64} {
  func.func @_bern_kernel(%arg0: i32, %arg1: memref<4xf32, #tpu.memory_space<smem>>, %arg2: memref<256x256xf32, #tpu.memory_space<vmem>>, %arg3: memref<256x128xf32, #tpu.memory_space<vmem>>, %arg4: memref<256x128xf32, #tpu.memory_space<vmem>>, %arg5: memref<256x256xf32, #tpu.memory_space<vmem>>) attributes {dimension_semantics = [#tpu.dimension_semantics<parallel>], iteration_bounds = array<i64: 2>, scalar_prefetch = 0 : i64, scratch_operands = 1 : i64, tpu.core_type = #tpu.core_type<tc>, window_params = [{transform_indices = @transform_0, window_bounds = array<i64: 4>}, {pipeline_mode = #tpu.pipeline_mode<synchronous>, transform_indices = @transform_1, window_bounds = array<i64: 256, 256>}, {transform_indices = @transform_2, window_bounds = array<i64: 256, 128>}, {transform_indices = @transform_3, window_bounds = array<i64: 256, 128>}]} {
    %c0 = arith.constant 0 : index
    %c0_0 = arith.constant 0 : index
    %0 = vector.load %arg3[%c0, %c0_0] : memref<256x128xf32, #tpu.memory_space<vmem>>, vector<256x128xf32>
    %c0_1 = arith.constant 0 : index
    %c0_2 = arith.constant 0 : index
    %1 = vector.load %arg2[%c0_1, %c0_2] : memref<256x256xf32, #tpu.memory_space<vmem>>, vector<256x256xf32>
    %c0_3 = arith.constant 0 : index
    %c0_4 = arith.constant 0 : index
    %2 = vector.load %arg5[%c0_3, %c0_4] : memref<256x256xf32, #tpu.memory_space<vmem>>, vector<256x128xf32>
    tpu.vector_store %arg5[%c0_3, %c0_4], %0 {strides = array<i32>} : memref<256x256xf32, #tpu.memory_space<vmem>>, vector<256x128xf32>,
    %c3 = arith.constant 3 : index
    %3 = memref.load %arg1[%c3] : memref<4xf32, #tpu.memory_space<smem>>
    %4 = vector.broadcast %3 : f32 to vector<256x128xf32>
    %5 = arith.mulf %4, %0 : vector<256x128xf32>
    %c0_5 = arith.constant 0 : index
    %c128 = arith.constant 128 : index
    %6 = vector.load %arg5[%c0_5, %c128] : memref<256x256xf32, #tpu.memory_space<vmem>>, vector<256x128xf32>
    tpu.vector_store %arg5[%c0_5, %c128], %5 {strides = array<i32>} : memref<256x256xf32, #tpu.memory_space<vmem>>, vector<256x128xf32>,
    %c0_6 = arith.constant 0 : index
    %c0_7 = arith.constant 0 : index
    %7 = vector.load %arg5[%c0_6, %c0_7] : memref<256x256xf32, #tpu.memory_space<vmem>>, vector<256x256xf32>
    %cst = arith.constant dense<0.000000e+00> : vector<256x256xf32>
    %8 = tpu.matmul %1, %7, %cst {dimension_numbers = #tpu.dot_dimension_numbers<[1], [0], [0], [1], [0, 0, 1, 1], [], []>} : vector<256x256xf32>, vector<256x256xf32>, vector<256x256xf32> -> vector<256x256xf32>
    %9 = vector.extract_strided_slice %7 {offsets = [0, 0], sizes = [256, 128], strides = [1, 1]} : vector<256x256xf32> to vector<256x128xf32>
    %cst_8 = arith.constant 2.000000e+00 : f32
    %10 = vector.broadcast %cst_8 : f32 to vector<256x128xf32>
    %11 = arith.mulf %10, %9 : vector<256x128xf32>
    %12 = vector.extract_strided_slice %8 {offsets = [0, 0], sizes = [256, 128], strides = [1, 1]} : vector<256x256xf32> to vector<256x128xf32>
    %13 = arith.subf %11, %12 : vector<256x128xf32>
    %14 = vector.extract_strided_slice %8 {offsets = [0, 128], sizes = [256, 128], strides = [1, 1]} : vector<256x256xf32> to vector<256x128xf32>
    %c2 = arith.constant 2 : index
    %15 = memref.load %arg1[%c2] : memref<4xf32, #tpu.memory_space<smem>>
    %16 = vector.broadcast %15 : f32 to vector<256x128xf32>
    %17 = arith.mulf %16, %13 : vector<256x128xf32>
    %18 = arith.addf %14, %17 : vector<256x128xf32>
    %c0_9 = arith.constant 0 : index
    %c0_10 = arith.constant 0 : index
    %19 = vector.load %arg5[%c0_9, %c0_10] : memref<256x256xf32, #tpu.memory_space<vmem>>, vector<256x128xf32>
    tpu.vector_store %arg5[%c0_9, %c0_10], %13 {strides = array<i32>} : memref<256x256xf32, #tpu.memory_space<vmem>>, vector<256x128xf32>,
    %c0_11 = arith.constant 0 : index
    %c128_12 = arith.constant 128 : index
    %20 = vector.load %arg5[%c0_11, %c128_12] : memref<256x256xf32, #tpu.memory_space<vmem>>, vector<256x128xf32>
    tpu.vector_store %arg5[%c0_11, %c128_12], %18 {strides = array<i32>} : memref<256x256xf32, #tpu.memory_space<vmem>>, vector<256x128xf32>,
    %c0_13 = arith.constant 0 : index
    %c0_14 = arith.constant 0 : index
    %21 = vector.load %arg5[%c0_13, %c0_14] : memref<256x256xf32, #tpu.memory_space<vmem>>, vector<256x256xf32>
    %cst_15 = arith.constant dense<0.000000e+00> : vector<256x256xf32>
    %22 = tpu.matmul %1, %21, %cst_15 {dimension_numbers = #tpu.dot_dimension_numbers<[1], [0], [0], [1], [0, 0, 1, 1], [], []>} : vector<256x256xf32>, vector<256x256xf32>, vector<256x256xf32> -> vector<256x256xf32>
    %23 = vector.extract_strided_slice %21 {offsets = [0, 0], sizes = [256, 128], strides = [1, 1]} : vector<256x256xf32> to vector<256x128xf32>
    %cst_16 = arith.constant 2.000000e+00 : f32
    %24 = vector.broadcast %cst_16 : f32 to vector<256x128xf32>
    %25 = arith.mulf %24, %23 : vector<256x128xf32>
    %26 = vector.extract_strided_slice %22 {offsets = [0, 0], sizes = [256, 128], strides = [1, 1]} : vector<256x256xf32> to vector<256x128xf32>
    %27 = arith.subf %25, %26 : vector<256x128xf32>
    %28 = vector.extract_strided_slice %22 {offsets = [0, 128], sizes = [256, 128], strides = [1, 1]} : vector<256x256xf32> to vector<256x128xf32>
    %c1 = arith.constant 1 : index
    %29 = memref.load %arg1[%c1] : memref<4xf32, #tpu.memory_space<smem>>
    %30 = vector.broadcast %29 : f32 to vector<256x128xf32>
    %31 = arith.mulf %30, %27 : vector<256x128xf32>
    %32 = arith.addf %28, %31 : vector<256x128xf32>
    %c0_17 = arith.constant 0 : index
    %c0_18 = arith.constant 0 : index
    %33 = vector.load %arg5[%c0_17, %c0_18] : memref<256x256xf32, #tpu.memory_space<vmem>>, vector<256x128xf32>
    tpu.vector_store %arg5[%c0_17, %c0_18], %27 {strides = array<i32>} : memref<256x256xf32, #tpu.memory_space<vmem>>, vector<256x128xf32>,
    %c0_19 = arith.constant 0 : index
    %c128_20 = arith.constant 128 : index
    %34 = vector.load %arg5[%c0_19, %c128_20] : memref<256x256xf32, #tpu.memory_space<vmem>>, vector<256x128xf32>
    tpu.vector_store %arg5[%c0_19, %c128_20], %32 {strides = array<i32>} : memref<256x256xf32, #tpu.memory_space<vmem>>, vector<256x128xf32>,
    %c0_21 = arith.constant 0 : index
    %c0_22 = arith.constant 0 : index
    %35 = vector.load %arg5[%c0_21, %c0_22] : memref<256x256xf32, #tpu.memory_space<vmem>>, vector<256x256xf32>
    %cst_23 = arith.constant dense<0.000000e+00> : vector<256x256xf32>
    %36 = tpu.matmul %1, %35, %cst_23 {dimension_numbers = #tpu.dot_dimension_numbers<[1], [0], [0], [1], [0, 0, 1, 1], [], []>} : vector<256x256xf32>, vector<256x256xf32>, vector<256x256xf32> -> vector<256x256xf32>
    %37 = vector.extract_strided_slice %35 {offsets = [0, 0], sizes = [256, 128], strides = [1, 1]} : vector<256x256xf32> to vector<256x128xf32>
    %cst_24 = arith.constant 2.000000e+00 : f32
    %38 = vector.broadcast %cst_24 : f32 to vector<256x128xf32>
    %39 = arith.mulf %38, %37 : vector<256x128xf32>
    %40 = vector.extract_strided_slice %36 {offsets = [0, 0], sizes = [256, 128], strides = [1, 1]} : vector<256x256xf32> to vector<256x128xf32>
    %41 = arith.subf %39, %40 : vector<256x128xf32>
    %42 = vector.extract_strided_slice %36 {offsets = [0, 128], sizes = [256, 128], strides = [1, 1]} : vector<256x256xf32> to vector<256x128xf32>
    %c0_25 = arith.constant 0 : index
    %43 = memref.load %arg1[%c0_25] : memref<4xf32, #tpu.memory_space<smem>>
    %44 = vector.broadcast %43 : f32 to vector<256x128xf32>
    %45 = arith.mulf %44, %41 : vector<256x128xf32>
    %46 = arith.addf %42, %45 : vector<256x128xf32>
    %c0_26 = arith.constant 0 : index
    %c0_27 = arith.constant 0 : index
    %47 = vector.load %arg4[%c0_26, %c0_27] : memref<256x128xf32, #tpu.memory_space<vmem>>, vector<256x128xf32>
    tpu.vector_store %arg4[%c0_26, %c0_27], %46 {strides = array<i32>} : memref<256x128xf32, #tpu.memory_space<vmem>>, vector<256x128xf32>,
    return
  }
  func.func @transform_0(%arg0: i32) -> i32 {
    %c0_i32 = arith.constant 0 : i32
    %c0_i32_0 = arith.constant 0 : i32
    return %c0_i32 : i32
  }
  func.func @transform_1(%arg0: i32) -> (i32, i32) {
    %c0_i32 = arith.constant 0 : i32
    %c0_i32_0 = arith.constant 0 : i32
    %c0_i32_1 = arith.constant 0 : i32
    return %c0_i32, %c0_i32_0 : i32, i32
  }
  func.func @transform_2(%arg0: i32) -> (i32, i32) {
    %c0_i32 = arith.constant 0 : i32
    %c0_i32_0 = arith.constant 0 : i32
    return %c0_i32, %arg0 : i32, i32
  }
  func.func @transform_3(%arg0: i32) -> (i32, i32) {
    %c0_i32 = arith.constant 0 : i32
    %c0_i32_0 = arith.constant 0 : i32
    return %c0_i32, %arg0 : i32, i32
  }
}

</mosaic_0001>

<llo_original>
// kernel: tpu_custom_call.1
$region0: #{tpu_custom_call.1}
  #allocation0 [shape = 'u32[]', space=smem, size = 0x4, offset = 0x4, fixed_abs, tag = 'smem constant byte address 0x4 - core index']
  #allocation1 [shape = 'u32[144,128]{1,0:T(1,128)}', space=vmem, size = 0x12000, scoped, tag = 'internal scratch']
  #allocation2 [shape = 'f32[256,256]{1,0:T(8,128)}', space=vmem, size = 0x40000, scoped, tag = 'scratch operand']
  %s0 = inlined_call_operand.hbm [shape: f32[4], index: 0, kind: input, shape index: {}]
  %s1 = inlined_call_operand.hbm [shape: f32[256,256], index: 1, kind: input, shape index: {}]
  %s2 = inlined_call_operand.hbm [shape: f32[256,256], index: 2, kind: input, shape index: {}]
  %s3 = inlined_call_operand.hbm [shape: f32[256,256], index: 3, kind: output, shape index: {}]
  %s4 = sld [smem:[#allocation0]]
  $region57: #{tpu_custom_call.1} parent=0
    _
  %s6 = ssub.s32 1, %s4
  %s7 = scalar_select 0, %s6, %s4
  $region1: #{tpu_custom_call.1} parent=0
    #allocation3 [shape = 'u8[512]{0}', space=smem, size = 0x200, scoped, tag = 'input window, operand 0, single buffered']
    #allocation4 [shape = 's32[2]{0}', space=sflag, size = 0x8, scoped, tag = 'scoped memory for tpu_custom_call.1']
    #allocation5 [shape = 's32[2]{0}', space=sflag, size = 0x8, scoped, tag = 'scoped memory for tpu_custom_call.1']
    #allocation6 [shape = 's32[2]{0}', space=sflag, size = 0x8, scoped, tag = 'scoped memory for tpu_custom_call.1']
    #allocation7 [shape = 'u8[262144]{0}', space=vmem, size = 0x40000, scoped, tag = 'input window, operand 1, single buffered']
    #allocation8 [shape = 'u8[262144]{0}', space=vmem, size = 0x40000, scoped, tag = 'input window, operand 2']
    #allocation9 [shape = 's32[2]{0}', space=sflag, size = 0x8, scoped, tag = 'scoped memory for tpu_custom_call.1']
    #allocation10 [shape = 'u8[262144]{0}', space=vmem, size = 0x40000, scoped, tag = 'output window, operand 0']
    %8 = vsyncpa [#allocation6], 0
    %9 = vsyncpa [#allocation4], 0
    %10 = vsyncpa [#allocation9], 0
    %s11 = scalar_lea.sflag [#allocation9], 1
    %12 = vsyncpa %s11, 0
    %13 = vsyncpa [#allocation5], 0
    %s14 = scalar_lea.sflag [#allocation5], 1
    %15 = vsyncpa %s14, 0
    loop: start=0, step=1, limit=4
    $region2: #{tpu_custom_call.1} parent=1 // loop_pre_header
      _
    $region3: #{tpu_custom_call.1} parent=1 // loop_header
      %s17 = sphi 0, %s21
      %p18 = scmp.ge.s32.totalorder %s17, 4
      %s25 = sphi 0, %s25
      %s27 = sphi 0, %s25
      %s28 = sphi 0, %s27
      %s42 = sphi 0, %s28
      %s46 = sphi 0, %s46
      %s48 = sphi 0, %s46
      %s49 = sphi 0, %s48
      %s63 = sphi 0, %s49
      %s69 = sphi 0, %s71
      %s72 = sphi 0, %s69
      %s73 = sphi 0, %s72
      %s89 = sphi 0, %s73
      %s95 = sphi 0, %s97
      %s98 = sphi 0, %s95
      %s99 = sphi 0, %s98
      %s115 = sphi 0, %s99
    $region4: #{tpu_custom_call.1} parent=1 // loop_header_branch
      %20 = sbr.rel (%p18) target = $region8
    $region5: #{tpu_custom_call.1} parent=1 // loop_body
      %s22 = ssub.s32 %s17, 1
      %s23 = ssub.s32 %s17, 2
      %s24 = sadd.s32 %s17, 1
      %s26 = sadd.s32 %s25, 1
      %p29 = scmp.eq.s32.totalorder %s17, 1
      %p30 = scmp.ne.s32.totalorder %s25, %s27
      %p31 = scmp.eq.s32.totalorder %s17, 0
      %p32 = por %p30, %p31
      %p33 = scmp.ne.s32.totalorder %s25, %s27
      %p34 = scmp.eq.s32.totalorder %s22, 1
      %p35 = por %p33, %p34
      %p36 = scmp.ne.s32.totalorder %s27, %s28
      %p37 = scmp.eq.s32.totalorder %s22, 0
      %p38 = por %p36, %p37
      %p39 = scmp.ne.s32.totalorder %s27, %s28
      %p40 = scmp.eq.s32.totalorder %s23, 1
      %p41 = por %p39, %p40
      %p43 = scmp.ne.s32.totalorder %s28, %s42
      %p44 = scmp.eq.s32.totalorder %s23, 0
      %p45 = por %p43, %p44
      %s47 = sadd.s32 %s46, 1
      %p50 = scmp.eq.s32.totalorder %s17, 1
      %p51 = scmp.ne.s32.totalorder %s46, %s48
      %p52 = scmp.eq.s32.totalorder %s17, 0
      %p53 = por %p51, %p52
      %p54 = scmp.ne.s32.totalorder %s46, %s48
      %p55 = scmp.eq.s32.totalorder %s22, 1
      %p56 = por %p54, %p55
      %p57 = scmp.ne.s32.totalorder %s48, %s49
      %p58 = scmp.eq.s32.totalorder %s22, 0
      %p59 = por %p57, %p58
      %p60 = scmp.ne.s32.totalorder %s48, %s49
      %p61 = scmp.eq.s32.totalorder %s23, 1
      %p62 = por %p60, %p61
      %p64 = scmp.ne.s32.totalorder %s49, %s63
      %p65 = scmp.eq.s32.totalorder %s23, 0
      %p66 = por %p64, %p65
      %s67 = ssub.s32 %s17, %s24
      %p68 = scmp.eq.s32.totalorder %s67, 0
      %s70 = sadd.s32 %s69, 1
      %s71 = scalar_select %p68, %s69, %s70
      %p74 = pneg %p68
      %p75 = scmp.eq.s32.totalorder %s17, 1
      %p76 = por %p74, %p75
      %p77 = scmp.ne.s32.totalorder %s69, %s72
      %p78 = scmp.eq.s32.totalorder %s17, 0
      %p79 = por %p77, %p78
      %p80 = scmp.ne.s32.totalorder %s69, %s72
      %p81 = scmp.eq.s32.totalorder %s22, 1
      %p82 = por %p80, %p81
      %p83 = scmp.ne.s32.totalorder %s72, %s73
      %p84 = scmp.eq.s32.totalorder %s22, 0
      %p85 = por %p83, %p84
      %p86 = scmp.ne.s32.totalorder %s72, %s73
      %p87 = scmp.eq.s32.totalorder %s23, 1
      %p88 = por %p86, %p87
      %p90 = scmp.ne.s32.totalorder %s73, %s89
      %p91 = scmp.eq.s32.totalorder %s23, 0
      %p92 = por %p90, %p91
      %s93 = ssub.s32 %s17, %s24
      %p94 = scmp.eq.s32.totalorder %s93, 0
      %s96 = sadd.s32 %s95, 1
      %s97 = scalar_select %p94, %s95, %s96
      %p100 = pneg %p94
      %p101 = scmp.eq.s32.totalorder %s17, 1
      %p102 = por %p100, %p101
      %p103 = scmp.ne.s32.totalorder %s95, %s98
      %p104 = scmp.eq.s32.totalorder %s17, 0
      %p105 = por %p103, %p104
      %p106 = scmp.ne.s32.totalorder %s95, %s98
      %p107 = scmp.eq.s32.totalorder %s22, 1
      %p108 = por %p106, %p107
      %p109 = scmp.ne.s32.totalorder %s98, %s99
      %p110 = scmp.eq.s32.totalorder %s22, 0
      %p111 = por %p109, %p110
      %p112 = scmp.ne.s32.totalorder %s98, %s99
      %p113 = scmp.eq.s32.totalorder %s23, 1
      %p114 = por %p112, %p113
      %p116 = scmp.ne.s32.totalorder %s99, %s115
      %p117 = scmp.eq.s32.totalorder %s23, 0
      %p118 = por %p116, %p117
      %p119 = scmp.le.s32.totalorder 1, %s17
      %p120 = scmp.lt.s32.totalorder %s17, 3
      %p121 = pnand %p119, %p120
      %p122 = pneg %p121
      // Predicated region
      $region9: #{tpu_custom_call.1} parent=5 // pred_check
        _
      $region10: #{tpu_custom_call.1} parent=5 // pred_check_branch
        %124 = sbr.rel (%p121) target = $region12
      $region11: #{tpu_custom_call.1} parent=5 // pred_region
        %s125 = ssub.s32 %s17, 1
        // Predicated region
        $region13: #{tpu_custom_call.1} parent=11 // pred_check
          %p126 = pneg %p38
        $region14: #{tpu_custom_call.1} parent=11 // pred_check_branch
          %128 = sbr.rel (%p126) target = $region16
        $region15: #{tpu_custom_call.1} parent=11 // pred_region
          %s130 = ssub.s32 16, 16
          %131 = vsyncadd [#allocation6], %s130
          %134 = dma.hbm_to_smem %s0, 16, [#allocation3], [#allocation6]
        $region16: #{tpu_custom_call.1} parent=11 // pred_fallthru
          _
        // Predicated region
        $region17: #{tpu_custom_call.1} parent=11 // pred_check
          %p135 = pneg %p59
        $region18: #{tpu_custom_call.1} parent=11 // pred_check_branch
          %137 = sbr.rel (%p135) target = $region20
        $region19: #{tpu_custom_call.1} parent=11 // pred_region
          %s139 = ssub.s32 8192, 8192
          %140 = vsyncadd [#allocation4], %s139
          %s141 = sshll.u32 [#allocation7], 4
          %s142 = int_to_ptr.vmem [resolvable:$true] %s141
          %147 = dma.hbm_to_vmem [thread:$0]  %s1, 8192, %s142, [#allocation4], 256, 256, 16
        $region20: #{tpu_custom_call.1} parent=11 // pred_fallthru
          _
      $region12: #{tpu_custom_call.1} parent=5 // pred_fallthru
        _
      %p148 = scmp.lt.s32.totalorder %s17, 2
      // Predicated region
      $region21: #{tpu_custom_call.1} parent=5 // pred_check
        %p149 = pneg %p148
      $region22: #{tpu_custom_call.1} parent=5 // pred_check_branch
        %151 = sbr.rel (%p149) target = $region24
      $region23: #{tpu_custom_call.1} parent=5 // pred_region
        // Predicated region
        $region25: #{tpu_custom_call.1} parent=23 // pred_check
          %p152 = pneg %p79
        $region26: #{tpu_custom_call.1} parent=23 // pred_check_branch
          %154 = sbr.rel (%p152) target = $region28
        $region27: #{tpu_custom_call.1} parent=23 // pred_region
          %s155 = sand.u32 %s69, 1
          %s156 = scalar_lea.sflag [#allocation9], %s155
          %s157 = sand.u32 %s69, 1
          %s158 = smul.addr %s157, 256
          %s159 = scalar_lea.vmem [#allocation8], %s158
          %s161 = ssub.s32 4096, 4096
          %162 = vsyncadd %s156, %s161
          %s163 = smul.addr %s17, 128
          %s164 = scalar_lea.hbm %s2, %s163
          %s165 = sshll.u32 %s159, 4
          %s166 = int_to_ptr.vmem [resolvable:$true] %s165
          %171 = dma.hbm_to_vmem [thread:$0]  %s164, 4096, %s166, %s156, 256, 128, 8
        $region28: #{tpu_custom_call.1} parent=23 // pred_fallthru
          _
      $region24: #{tpu_custom_call.1} parent=5 // pred_fallthru
        _
      %p172 = scmp.le.s32.totalorder 1, %s17
      %p173 = scmp.lt.s32.totalorder %s17, 3
      %p174 = pnand %p172, %p173
      %p175 = pneg %p174
      // Predicated region
      $region29: #{tpu_custom_call.1} parent=5 // pred_check
        _
      $region30: #{tpu_custom_call.1} parent=5 // pred_check_branch
        %177 = sbr.rel (%p174) target = $region32
      $region31: #{tpu_custom_call.1} parent=5 // pred_region
        %s178 = ssub.s32 %s17, 1
        // Predicated region
        $region33: #{tpu_custom_call.1} parent=31 // pred_check
          %p179 = pneg %p38
        $region34: #{tpu_custom_call.1} parent=31 // pred_check_branch
          %181 = sbr.rel (%p179) target = $region36
        $region35: #{tpu_custom_call.1} parent=31 // pred_region
          %182 = dma.done [#allocation6], 16
        $region36: #{tpu_custom_call.1} parent=31 // pred_fallthru
          _
        // Predicated region
        $region37: #{tpu_custom_call.1} parent=31 // pred_check
          %p183 = pneg %p59
        $region38: #{tpu_custom_call.1} parent=31 // pred_check_branch
          %185 = sbr.rel (%p183) target = $region40
        $region39: #{tpu_custom_call.1} parent=31 // pred_region
          %186 = dma.done [#allocation4], 8192
        $region40: #{tpu_custom_call.1} parent=31 // pred_fallthru
          _
        %s187 = sand.u32 %s72, 1
        %s188 = scalar_lea.sflag [#allocation9], %s187
        %s189 = sand.u32 %s72, 1
        %s190 = smul.addr %s189, 256
        %s191 = scalar_lea.vmem [#allocation8], %s190
        // Predicated region
        $region41: #{tpu_custom_call.1} parent=31 // pred_check
          %p192 = pneg %p85
        $region42: #{tpu_custom_call.1} parent=31 // pred_check_branch
          %194 = sbr.rel (%p192) target = $region44
        $region43: #{tpu_custom_call.1} parent=31 // pred_region
          %195 = dma.done %s188, 4096
        $region44: #{tpu_custom_call.1} parent=31 // pred_fallthru
          _
        %196 = sfence
        %p197 = pneg %p38
        %p198 = pneg %p35
        %p199 = pneg %p59
        %p200 = pneg %p56
        %s201 = sand.u32 %s72, 1
        %s202 = scalar_lea.sflag [#allocation9], %s201
        %s203 = sand.u32 %s72, 1
        %s204 = smul.addr %s203, 256
        %s205 = scalar_lea.vmem [#allocation8], %s204
        %p206 = pneg %p85
        %p207 = pneg %p82
        %p208 = pneg %p111
        %p209 = pneg %p108
        %s210 = sand.u32 %s98, 1
        %s211 = scalar_lea.sflag [#allocation5], %s210
        %s212 = sand.u32 %s98, 1
        %s213 = smul.addr %s212, 256
        %s214 = scalar_lea.vmem [#allocation10], %s213
        %v215 = vld [vmem:[%s191] sm:$0xff]
        %v216 = vld [vmem:[%s191 + $0x8] sm:$0xff]
        %v217 = vld [vmem:[%s191 + $0x10] sm:$0xff]
        %v218 = vld [vmem:[%s191 + $0x18] sm:$0xff]
        %v219 = vld [vmem:[%s191 + $0x20] sm:$0xff]
        %v220 = vld [vmem:[%s191 + $0x28] sm:$0xff]
        %v221 = vld [vmem:[%s191 + $0x30] sm:$0xff]
        %v222 = vld [vmem:[%s191 + $0x38] sm:$0xff]
        %v223 = vld [vmem:[%s191 + $0x40] sm:$0xff]
        %v224 = vld [vmem:[%s191 + $0x48] sm:$0xff]
        %v225 = vld [vmem:[%s191 + $0x50] sm:$0xff]
        %v226 = vld [vmem:[%s191 + $0x58] sm:$0xff]
        %v227 = vld [vmem:[%s191 + $0x60] sm:$0xff]
        %v228 = vld [vmem:[%s191 + $0x68] sm:$0xff]
        %v229 = vld [vmem:[%s191 + $0x70] sm:$0xff]
        %v230 = vld [vmem:[%s191 + $0x78] sm:$0xff]
        %v231 = vld [vmem:[%s191 + $0x80] sm:$0xff]
        %v232 = vld [vmem:[%s191 + $0x88] sm:$0xff]
        %v233 = vld [vmem:[%s191 + $0x90] sm:$0xff]
        %v234 = vld [vmem:[%s191 + $0x98] sm:$0xff]
        %v235 = vld [vmem:[%s191 + $0xa0] sm:$0xff]
        %v236 = vld [vmem:[%s191 + $0xa8] sm:$0xff]
        %v237 = vld [vmem:[%s191 + $0xb0] sm:$0xff]
        %v238 = vld [vmem:[%s191 + $0xb8] sm:$0xff]
        %v239 = vld [vmem:[%s191 + $0xc0] sm:$0xff]
        %v240 = vld [vmem:[%s191 + $0xc8] sm:$0xff]
        %v241 = vld [vmem:[%s191 + $0xd0] sm:$0xff]
        %v242 = vld [vmem:[%s191 + $0xd8] sm:$0xff]
        %v243 = vld [vmem:[%s191 + $0xe0] sm:$0xff]
        %v244 = vld [vmem:[%s191 + $0xe8] sm:$0xff]
        %v245 = vld [vmem:[%s191 + $0xf0] sm:$0xff]
        %v246 = vld [vmem:[%s191 + $0xf8] sm:$0xff]
        %v247 = vld [vmem:[#allocation7] sm:$0xff]
        %v248 = vld [vmem:[#allocation7 + $0x8] sm:$0xff]
        %v249 = vld [vmem:[#allocation7 + $0x10] sm:$0xff]
        %v250 = vld [vmem:[#allocation7 + $0x18] sm:$0xff]
        %v251 = vld [vmem:[#allocation7 + $0x20] sm:$0xff]
        %v252 = vld [vmem:[#allocation7 + $0x28] sm:$0xff]
        %v253 = vld [vmem:[#allocation7 + $0x30] sm:$0xff]
        %v254 = vld [vmem:[#allocation7 + $0x38] sm:$0xff]
        %v255 = vld [vmem:[#allocation7 + $0x40] sm:$0xff]
        %v256 = vld [vmem:[#allocation7 + $0x48] sm:$0xff]
        %v257 = vld [vmem:[#allocation7 + $0x50] sm:$0xff]
        %v258 = vld [vmem:[#allocation7 + $0x58] sm:$0xff]
        %v259 = vld [vmem:[#allocation7 + $0x60] sm:$0xff]
        %v260 = vld [vmem:[#allocation7 + $0x68] sm:$0xff]
        %v261 = vld [vmem:[#allocation7 + $0x70] sm:$0xff]
        %v262 = vld [vmem:[#allocation7 + $0x78] sm:$0xff]
        %v263 = vld [vmem:[#allocation7 + $0x80] sm:$0xff]
        %v264 = vld [vmem:[#allocation7 + $0x88] sm:$0xff]
        %v265 = vld [vmem:[#allocation7 + $0x90] sm:$0xff]
        %v266 = vld [vmem:[#allocation7 + $0x98] sm:$0xff]
        %v267 = vld [vmem:[#allocation7 + $0xa0] sm:$0xff]
        %v268 = vld [vmem:[#allocation7 + $0xa8] sm:$0xff]
        %v269 = vld [vmem:[#allocation7 + $0xb0] sm:$0xff]
        %v270 = vld [vmem:[#allocation7 + $0xb8] sm:$0xff]
        %v271 = vld [vmem:[#allocation7 + $0xc0] sm:$0xff]
        %v272 = vld [vmem:[#allocation7 + $0xc8] sm:$0xff]
        %v273 = vld [vmem:[#allocation7 + $0xd0] sm:$0xff]
        %v274 = vld [vmem:[#allocation7 + $0xd8] sm:$0xff]
        %v275 = vld [vmem:[#allocation7 + $0xe0] sm:$0xff]
        %v276 = vld [vmem:[#allocation7 + $0xe8] sm:$0xff]
        %v277 = vld [vmem:[#allocation7 + $0xf0] sm:$0xff]
        %v278 = vld [vmem:[#allocation7 + $0xf8] sm:$0xff]
        %v279 = vld [vmem:[#allocation7 + $0x100] sm:$0xff]
        %v280 = vld [vmem:[#allocation7 + $0x108] sm:$0xff]
        %v281 = vld [vmem:[#allocation7 + $0x110] sm:$0xff]
        %v282 = vld [vmem:[#allocation7 + $0x118] sm:$0xff]
        %v283 = vld [vmem:[#allocation7 + $0x120] sm:$0xff]
        %v284 = vld [vmem:[#allocation7 + $0x128] sm:$0xff]
        %v285 = vld [vmem:[#allocation7 + $0x130] sm:$0xff]
        %v286 = vld [vmem:[#allocation7 + $0x138] sm:$0xff]
        %v287 = vld [vmem:[#allocation7 + $0x140] sm:$0xff]
        %v288 = vld [vmem:[#allocation7 + $0x148] sm:$0xff]
        %v289 = vld [vmem:[#allocation7 + $0x150] sm:$0xff]
        %v290 = vld [vmem:[#allocation7 + $0x158] sm:$0xff]
        %v291 = vld [vmem:[#allocation7 + $0x160] sm:$0xff]
        %v292 = vld [vmem:[#allocation7 + $0x168] sm:$0xff]
        %v293 = vld [vmem:[#allocation7 + $0x170] sm:$0xff]
        %v294 = vld [vmem:[#allocation7 + $0x178] sm:$0xff]
        %v295 = vld [vmem:[#allocation7 + $0x180] sm:$0xff]
        %v296 = vld [vmem:[#allocation7 + $0x188] sm:$0xff]
        %v297 = vld [vmem:[#allocation7 + $0x190] sm:$0xff]
        %v298 = vld [vmem:[#allocation7 + $0x198] sm:$0xff]
        %v299 = vld [vmem:[#allocation7 + $0x1a0] sm:$0xff]
        %v300 = vld [vmem:[#allocation7 + $0x1a8] sm:$0xff]
        %v301 = vld [vmem:[#allocation7 + $0x1b0] sm:$0xff]
        %v302 = vld [vmem:[#allocation7 + $0x1b8] sm:$0xff]
        %v303 = vld [vmem:[#allocation7 + $0x1c0] sm:$0xff]
        %v304 = vld [vmem:[#allocation7 + $0x1c8] sm:$0xff]
        %v305 = vld [vmem:[#allocation7 + $0x1d0] sm:$0xff]
        %v306 = vld [vmem:[#allocation7 + $0x1d8] sm:$0xff]
        %v307 = vld [vmem:[#allocation7 + $0x1e0] sm:$0xff]
        %v308 = vld [vmem:[#allocation7 + $0x1e8] sm:$0xff]
        %v309 = vld [vmem:[#allocation7 + $0x1f0] sm:$0xff]
        %v310 = vld [vmem:[#allocation7 + $0x1f8] sm:$0xff]
        %311 = vst [vmem:[#allocation2] sm:$0xff] %v215
        %312 = vst [vmem:[#allocation2 + $0x10] sm:$0xff] %v216
        %313 = vst [vmem:[#allocation2 + $0x20] sm:$0xff] %v217
        %314 = vst [vmem:[#allocation2 + $0x30] sm:$0xff] %v218
        %315 = vst [vmem:[#allocation2 + $0x40] sm:$0xff] %v219
        %316 = vst [vmem:[#allocation2 + $0x50] sm:$0xff] %v220
        %317 = vst [vmem:[#allocation2 + $0x60] sm:$0xff] %v221
        %318 = vst [vmem:[#allocation2 + $0x70] sm:$0xff] %v222
        %319 = vst [vmem:[#allocation2 + $0x80] sm:$0xff] %v223
        %320 = vst [vmem:[#allocation2 + $0x90] sm:$0xff] %v224
        %321 = vst [vmem:[#allocation2 + $0xa0] sm:$0xff] %v225
        %322 = vst [vmem:[#allocation2 + $0xb0] sm:$0xff] %v226
        %323 = vst [vmem:[#allocation2 + $0xc0] sm:$0xff] %v227
        %324 = vst [vmem:[#allocation2 + $0xd0] sm:$0xff] %v228
        %325 = vst [vmem:[#allocation2 + $0xe0] sm:$0xff] %v229
        %326 = vst [vmem:[#allocation2 + $0xf0] sm:$0xff] %v230
        %327 = vst [vmem:[#allocation2 + $0x100] sm:$0xff] %v231
        %328 = vst [vmem:[#allocation2 + $0x110] sm:$0xff] %v232
        %329 = vst [vmem:[#allocation2 + $0x120] sm:$0xff] %v233
        %330 = vst [vmem:[#allocation2 + $0x130] sm:$0xff] %v234
        %331 = vst [vmem:[#allocation2 + $0x140] sm:$0xff] %v235
        %332 = vst [vmem:[#allocation2 + $0x150] sm:$0xff] %v236
        %333 = vst [vmem:[#allocation2 + $0x160] sm:$0xff] %v237
        %334 = vst [vmem:[#allocation2 + $0x170] sm:$0xff] %v238
        %335 = vst [vmem:[#allocation2 + $0x180] sm:$0xff] %v239
        %336 = vst [vmem:[#allocation2 + $0x190] sm:$0xff] %v240
        %337 = vst [vmem:[#allocation2 + $0x1a0] sm:$0xff] %v241
        %338 = vst [vmem:[#allocation2 + $0x1b0] sm:$0xff] %v242
        %339 = vst [vmem:[#allocation2 + $0x1c0] sm:$0xff] %v243
        %340 = vst [vmem:[#allocation2 + $0x1d0] sm:$0xff] %v244
        %341 = vst [vmem:[#allocation2 + $0x1e0] sm:$0xff] %v245
        %342 = vst [vmem:[#allocation2 + $0x1f0] sm:$0xff] %v246
        %s343 = sld [smem:[#allocation3 + $0x3]]
        %v344 = vstv %s343
        %v345 = vmul.f32 %v344, %v215
        %v346 = vmul.f32 %v344, %v216
        %v347 = vmul.f32 %v344, %v217
        %v348 = vmul.f32 %v344, %v218
        %v349 = vmul.f32 %v344, %v219
        %v350 = vmul.f32 %v344, %v220
        %v351 = vmul.f32 %v344, %v221
        %v352 = vmul.f32 %v344, %v222
        %v353 = vmul.f32 %v344, %v223
        %v354 = vmul.f32 %v344, %v224
        %v355 = vmul.f32 %v344, %v225
        %v356 = vmul.f32 %v344, %v226
        %v357 = vmul.f32 %v344, %v227
        %v358 = vmul.f32 %v344, %v228
        %v359 = vmul.f32 %v344, %v229
        %v360 = vmul.f32 %v344, %v230
        %v361 = vmul.f32 %v344, %v231
        %v362 = vmul.f32 %v344, %v232
        %v363 = vmul.f32 %v344, %v233
        %v364 = vmul.f32 %v344, %v234
        %v365 = vmul.f32 %v344, %v235
        %v366 = vmul.f32 %v344, %v236
        %v367 = vmul.f32 %v344, %v237
        %v368 = vmul.f32 %v344, %v238
        %v369 = vmul.f32 %v344, %v239
        %v370 = vmul.f32 %v344, %v240
        %v371 = vmul.f32 %v344, %v241
        %v372 = vmul.f32 %v344, %v242
        %v373 = vmul.f32 %v344, %v243
        %v374 = vmul.f32 %v344, %v244
        %v375 = vmul.f32 %v344, %v245
        %v376 = vmul.f32 %v344, %v246
        %377 = vst [vmem:[#allocation2 + $0x8] sm:$0xff] %v345
        %378 = vst [vmem:[#allocation2 + $0x18] sm:$0xff] %v346
        %379 = vst [vmem:[#allocation2 + $0x28] sm:$0xff] %v347
        %380 = vst [vmem:[#allocation2 + $0x38] sm:$0xff] %v348
        %381 = vst [vmem:[#allocation2 + $0x48] sm:$0xff] %v349
        %382 = vst [vmem:[#allocation2 + $0x58] sm:$0xff] %v350
        %383 = vst [vmem:[#allocation2 + $0x68] sm:$0xff] %v351
        %384 = vst [vmem:[#allocation2 + $0x78] sm:$0xff] %v352
        %385 = vst [vmem:[#allocation2 + $0x88] sm:$0xff] %v353
        %386 = vst [vmem:[#allocation2 + $0x98] sm:$0xff] %v354
        %387 = vst [vmem:[#allocation2 + $0xa8] sm:$0xff] %v355
        %388 = vst [vmem:[#allocation2 + $0xb8] sm:$0xff] %v356
        %389 = vst [vmem:[#allocation2 + $0xc8] sm:$0xff] %v357
        %390 = vst [vmem:[#allocation2 + $0xd8] sm:$0xff] %v358
        %391 = vst [vmem:[#allocation2 + $0xe8] sm:$0xff] %v359
        %392 = vst [vmem:[#allocation2 + $0xf8] sm:$0xff] %v360
        %393 = vst [vmem:[#allocation2 + $0x108] sm:$0xff] %v361
        %394 = vst [vmem:[#allocation2 + $0x118] sm:$0xff] %v362
        %395 = vst [vmem:[#allocation2 + $0x128] sm:$0xff] %v363
        %396 = vst [vmem:[#allocation2 + $0x138] sm:$0xff] %v364
        %397 = vst [vmem:[#allocation2 + $0x148] sm:$0xff] %v365
        %398 = vst [vmem:[#allocation2 + $0x158] sm:$0xff] %v366
        %399 = vst [vmem:[#allocation2 + $0x168] sm:$0xff] %v367
        %400 = vst [vmem:[#allocation2 + $0x178] sm:$0xff] %v368
        %401 = vst [vmem:[#allocation2 + $0x188] sm:$0xff] %v369
        %402 = vst [vmem:[#allocation2 + $0x198] sm:$0xff] %v370
        %403 = vst [vmem:[#allocation2 + $0x1a8] sm:$0xff] %v371
        %404 = vst [vmem:[#allocation2 + $0x1b8] sm:$0xff] %v372
        %405 = vst [vmem:[#allocation2 + $0x1c8] sm:$0xff] %v373
        %406 = vst [vmem:[#allocation2 + $0x1d8] sm:$0xff] %v374
        %407 = vst [vmem:[#allocation2 + $0x1e8] sm:$0xff] %v375
        %408 = vst [vmem:[#allocation2 + $0x1f8] sm:$0xff] %v376
        %v409 = vld [vmem:[#allocation2] sm:$0xff]
        %v410 = vld [vmem:[#allocation2 + $0x8] sm:$0xff]
        %v411 = vld [vmem:[#allocation2 + $0x10] sm:$0xff]
        %v412 = vld [vmem:[#allocation2 + $0x18] sm:$0xff]
        %v413 = vld [vmem:[#allocation2 + $0x20] sm:$0xff]
        %v414 = vld [vmem:[#allocation2 + $0x28] sm:$0xff]
        %v415 = vld [vmem:[#allocation2 + $0x30] sm:$0xff]
        %v416 = vld [vmem:[#allocation2 + $0x38] sm:$0xff]
        %v417 = vld [vmem:[#allocation2 + $0x40] sm:$0xff]
        %v418 = vld [vmem:[#allocation2 + $0x48] sm:$0xff]
        %v419 = vld [vmem:[#allocation2 + $0x50] sm:$0xff]
        %v420 = vld [vmem:[#allocation2 + $0x58] sm:$0xff]
        %v421 = vld [vmem:[#allocation2 + $0x60] sm:$0xff]
        %v422 = vld [vmem:[#allocation2 + $0x68] sm:$0xff]
        %v423 = vld [vmem:[#allocation2 + $0x70] sm:$0xff]
        %v424 = vld [vmem:[#allocation2 + $0x78] sm:$0xff]
        %v425 = vld [vmem:[#allocation2 + $0x80] sm:$0xff]
        %v426 = vld [vmem:[#allocation2 + $0x88] sm:$0xff]
        %v427 = vld [vmem:[#allocation2 + $0x90] sm:$0xff]
        %v428 = vld [vmem:[#allocation2 + $0x98] sm:$0xff]
        %v429 = vld [vmem:[#allocation2 + $0xa0] sm:$0xff]
        %v430 = vld [vmem:[#allocation2 + $0xa8] sm:$0xff]
        %v431 = vld [vmem:[#allocation2 + $0xb0] sm:$0xff]
        %v432 = vld [vmem:[#allocation2 + $0xb8] sm:$0xff]
        %v433 = vld [vmem:[#allocation2 + $0xc0] sm:$0xff]
        %v434 = vld [vmem:[#allocation2 + $0xc8] sm:$0xff]
        %v435 = vld [vmem:[#allocation2 + $0xd0] sm:$0xff]
        %v436 = vld [vmem:[#allocation2 + $0xd8] sm:$0xff]
        %v437 = vld [vmem:[#allocation2 + $0xe0] sm:$0xff]
        %v438 = vld [vmem:[#allocation2 + $0xe8] sm:$0xff]
        %v439 = vld [vmem:[#allocation2 + $0xf0] sm:$0xff]
        %v440 = vld [vmem:[#allocation2 + $0xf8] sm:$0xff]
        %v441 = vld [vmem:[#allocation2 + $0x100] sm:$0xff]
        %v442 = vld [vmem:[#allocation2 + $0x108] sm:$0xff]
        %v443 = vld [vmem:[#allocation2 + $0x110] sm:$0xff]
        %v444 = vld [vmem:[#allocation2 + $0x118] sm:$0xff]
        %v445 = vld [vmem:[#allocation2 + $0x120] sm:$0xff]
        %v446 = vld [vmem:[#allocation2 + $0x128] sm:$0xff]
        %v447 = vld [vmem:[#allocation2 + $0x130] sm:$0xff]
        %v448 = vld [vmem:[#allocation2 + $0x138] sm:$0xff]
        %v449 = vld [vmem:[#allocation2 + $0x140] sm:$0xff]
        %v450 = vld [vmem:[#allocation2 + $0x148] sm:$0xff]
        %v451 = vld [vmem:[#allocation2 + $0x150] sm:$0xff]
        %v452 = vld [vmem:[#allocation2 + $0x158] sm:$0xff]
        %v453 = vld [vmem:[#allocation2 + $0x160] sm:$0xff]
        %v454 = vld [vmem:[#allocation2 + $0x168] sm:$0xff]
        %v455 = vld [vmem:[#allocation2 + $0x170] sm:$0xff]
        %v456 = vld [vmem:[#allocation2 + $0x178] sm:$0xff]
        %v457 = vld [vmem:[#allocation2 + $0x180] sm:$0xff]
        %v458 = vld [vmem:[#allocation2 + $0x188] sm:$0xff]
        %v459 = vld [vmem:[#allocation2 + $0x190] sm:$0xff]
        %v460 = vld [vmem:[#allocation2 + $0x198] sm:$0xff]
        %v461 = vld [vmem:[#allocation2 + $0x1a0] sm:$0xff]
        %v462 = vld [vmem:[#allocation2 + $0x1a8] sm:$0xff]
        %v463 = vld [vmem:[#allocation2 + $0x1b0] sm:$0xff]
        %v464 = vld [vmem:[#allocation2 + $0x1b8] sm:$0xff]
        %v465 = vld [vmem:[#allocation2 + $0x1c0] sm:$0xff]
        %v466 = vld [vmem:[#allocation2 + $0x1c8] sm:$0xff]
        %v467 = vld [vmem:[#allocation2 + $0x1d0] sm:$0xff]
        %v468 = vld [vmem:[#allocation2 + $0x1d8] sm:$0xff]
        %v469 = vld [vmem:[#allocation2 + $0x1e0] sm:$0xff]
        %v470 = vld [vmem:[#allocation2 + $0x1e8] sm:$0xff]
        %v471 = vld [vmem:[#allocation2 + $0x1f0] sm:$0xff]
        %v472 = vld [vmem:[#allocation2 + $0x1f8] sm:$0xff]
        %473 = vmatprep.subr.mxu0 %v440
        %474 = vmatpush1.msra.mxu0 %v439
        %475 = vmatprep.subr.mxu0 %v438
        %476 = vmatpush1.msra.mxu0 %v437
        %477 = vmatprep.subr.mxu0 %v436
        %478 = vmatpush1.msra.mxu0 %v435
        %479 = vmatprep.subr.mxu0 %v434
        %480 = vmatpush1.msra.mxu0 %v433
        %481 = vmatprep.subr.mxu0 %v432
        %482 = vmatpush1.msra.mxu0 %v431
        %483 = vmatprep.subr.mxu0 %v430
        %484 = vmatpush1.msra.mxu0 %v429
        %485 = vmatprep.subr.mxu0 %v428
        %486 = vmatpush1.msra.mxu0 %v427
        %487 = vmatprep.subr.mxu0 %v426
        %488 = vmatpush1.msra.mxu0 %v425
        %489 = vmatprep.subr.mxu0 %v424
        %490 = vmatpush1.msra.mxu0 %v423
        %491 = vmatprep.subr.mxu0 %v422
        %492 = vmatpush1.msra.mxu0 %v421
        %493 = vmatprep.subr.mxu0 %v420
        %494 = vmatpush1.msra.mxu0 %v419
        %495 = vmatprep.subr.mxu0 %v418
        %496 = vmatpush1.msra.mxu0 %v417
        %497 = vmatprep.subr.mxu0 %v416
        %498 = vmatpush1.msra.mxu0 %v415
        %499 = vmatprep.subr.mxu0 %v414
        %500 = vmatpush1.msra.mxu0 %v413
        %501 = vmatprep.subr.mxu0 %v412
        %502 = vmatpush1.msra.mxu0 %v411
        %503 = vmatprep.subr.mxu0 %v410
        %504 = vmatpush1.msra.mxu0 %v409
        %505 = vmatprep.subr.mxu0 %v472
        %506 = vmatpush2.msra.mxu0 %v471
        %507 = vmatprep.subr.mxu0 %v470
        %508 = vmatpush2.msra.mxu0 %v469
        %509 = vmatprep.subr.mxu0 %v468
        %510 = vmatpush2.msra.mxu0 %v467
        %511 = vmatprep.subr.mxu0 %v466
        %512 = vmatpush2.msra.mxu0 %v465
        %513 = vmatprep.subr.mxu0 %v464
        %514 = vmatpush2.msra.mxu0 %v463
        %515 = vmatprep.subr.mxu0 %v462
        %516 = vmatpush2.msra.mxu0 %v461
        %517 = vmatprep.subr.mxu0 %v460
        %518 = vmatpush2.msra.mxu0 %v459
        %519 = vmatprep.subr.mxu0 %v458
        %520 = vmatpush2.msra.mxu0 %v457
        %521 = vmatprep.subr.mxu0 %v456
        %522 = vmatpush2.msra.mxu0 %v455
        %523 = vmatprep.subr.mxu0 %v454
        %524 = vmatpush2.msra.mxu0 %v453
        %525 = vmatprep.subr.mxu0 %v452
        %526 = vmatpush2.msra.mxu0 %v451
        %527 = vmatprep.subr.mxu0 %v450
        %528 = vmatpush2.msra.mxu0 %v449
        %529 = vmatprep.subr.mxu0 %v448
        %530 = vmatpush2.msra.mxu0 %v447
        %531 = vmatprep.subr.mxu0 %v446
        %532 = vmatpush2.msra.mxu0 %v445
        %533 = vmatprep.subr.mxu0 %v444
        %534 = vmatpush2.msra.mxu0 %v443
        %535 = vmatprep.subr.mxu0 %v442
        %536 = vmatpush2.msra.mxu0 %v441
        %537 = vmatprep.mubr.f32.mxu0 %v248
        %538 = vmatmul.mubr.f32.gmra.mxu0 %v247
        %v539 = vpop.f32.mrf.mxu0
        %v540 = vadd.f32 0.0, %v539
        %v541 = vpop.f32.mrf.mxu0
        %v542 = vadd.f32 0.0, %v541
        %543 = vmatprep.mubr.f32.mxu0 %v250
        %544 = vmatmul.mubr.f32.gmra.mxu0 %v249
        %v545 = vpop.f32.mrf.mxu0
        %v546 = vadd.f32 0.0, %v545
        %v547 = vpop.f32.mrf.mxu0
        %v548 = vadd.f32 0.0, %v547
        %549 = vmatprep.mubr.f32.mxu0 %v252
        %550 = vmatmul.mubr.f32.gmra.mxu0 %v251
        %v551 = vpop.f32.mrf.mxu0
        %v552 = vadd.f32 0.0, %v551
        %v553 = vpop.f32.mrf.mxu0
        %v554 = vadd.f32 0.0, %v553
        %555 = vmatprep.mubr.f32.mxu0 %v254
        %556 = vmatmul.mubr.f32.gmra.mxu0 %v253
        %v557 = vpop.f32.mrf.mxu0
        %v558 = vadd.f32 0.0, %v557
        %v559 = vpop.f32.mrf.mxu0
        %v560 = vadd.f32 0.0, %v559
        %561 = vmatprep.mubr.f32.mxu0 %v256
        %562 = vmatmul.mubr.f32.gmra.mxu0 %v255
        %v563 = vpop.f32.mrf.mxu0
        %v564 = vadd.f32 0.0, %v563
        %v565 = vpop.f32.mrf.mxu0
        %v566 = vadd.f32 0.0, %v565
        %567 = vmatprep.mubr.f32.mxu0 %v258
        %568 = vmatmul.mubr.f32.gmra.mxu0 %v257
        %v569 = vpop.f32.mrf.mxu0
        %v570 = vadd.f32 0.0, %v569
        %v571 = vpop.f32.mrf.mxu0
        %v572 = vadd.f32 0.0, %v571
        %573 = vmatprep.mubr.f32.mxu0 %v260
        %574 = vmatmul.mubr.f32.gmra.mxu0 %v259
        %v575 = vpop.f32.mrf.mxu0
        %v576 = vadd.f32 0.0, %v575
        %v577 = vpop.f32.mrf.mxu0
        %v578 = vadd.f32 0.0, %v577
        %579 = vmatprep.mubr.f32.mxu0 %v262
        %580 = vmatmul.mubr.f32.gmra.mxu0 %v261
        %v581 = vpop.f32.mrf.mxu0
        %v582 = vadd.f32 0.0, %v581
        %v583 = vpop.f32.mrf.mxu0
        %v584 = vadd.f32 0.0, %v583
        %585 = vmatprep.mubr.f32.mxu0 %v264
        %586 = vmatmul.mubr.f32.gmra.mxu0 %v263
        %v587 = vpop.f32.mrf.mxu0
        %v588 = vadd.f32 0.0, %v587
        %v589 = vpop.f32.mrf.mxu0
        %v590 = vadd.f32 0.0, %v589
        %591 = vmatprep.mubr.f32.mxu0 %v266
        %592 = vmatmul.mubr.f32.gmra.mxu0 %v265
        %v593 = vpop.f32.mrf.mxu0
        %v594 = vadd.f32 0.0, %v593
        %v595 = vpop.f32.mrf.mxu0
        %v596 = vadd.f32 0.0, %v595
        %597 = vmatprep.mubr.f32.mxu0 %v268
        %598 = vmatmul.mubr.f32.gmra.mxu0 %v267
        %v599 = vpop.f32.mrf.mxu0
        %v600 = vadd.f32 0.0, %v599
        %v601 = vpop.f32.mrf.mxu0
        %v602 = vadd.f32 0.0, %v601
        %603 = vmatprep.mubr.f32.mxu0 %v270
        %604 = vmatmul.mubr.f32.gmra.mxu0 %v269
        %v605 = vpop.f32.mrf.mxu0
        %v606 = vadd.f32 0.0, %v605
        %v607 = vpop.f32.mrf.mxu0
        %v608 = vadd.f32 0.0, %v607
        %609 = vmatprep.mubr.f32.mxu0 %v272
        %610 = vmatmul.mubr.f32.gmra.mxu0 %v271
        %v611 = vpop.f32.mrf.mxu0
        %v612 = vadd.f32 0.0, %v611
        %v613 = vpop.f32.mrf.mxu0
        %v614 = vadd.f32 0.0, %v613
        %615 = vmatprep.mubr.f32.mxu0 %v274
        %616 = vmatmul.mubr.f32.gmra.mxu0 %v273
        %v617 = vpop.f32.mrf.mxu0
        %v618 = vadd.f32 0.0, %v617
        %v619 = vpop.f32.mrf.mxu0
        %v620 = vadd.f32 0.0, %v619
        %621 = vmatprep.mubr.f32.mxu0 %v276
        %622 = vmatmul.mubr.f32.gmra.mxu0 %v275
        %v623 = vpop.f32.mrf.mxu0
        %v624 = vadd.f32 0.0, %v623
        %v625 = vpop.f32.mrf.mxu0
        %v626 = vadd.f32 0.0, %v625
        %627 = vmatprep.mubr.f32.mxu0 %v278
        %628 = vmatmul.mubr.f32.gmra.mxu0 %v277
        %v629 = vpop.f32.mrf.mxu0
        %v630 = vadd.f32 0.0, %v629
        %v631 = vpop.f32.mrf.mxu0
        %v632 = vadd.f32 0.0, %v631
        %633 = vmatprep.mubr.f32.mxu0 %v280
        %634 = vmatmul.mubr.f32.gmra.mxu0 %v279
        %v635 = vpop.f32.mrf.mxu0
        %v636 = vadd.f32 0.0, %v635
        %v637 = vpop.f32.mrf.mxu0
        %v638 = vadd.f32 0.0, %v637
        %639 = vmatprep.mubr.f32.mxu0 %v282
        %640 = vmatmul.mubr.f32.gmra.mxu0 %v281
        %v641 = vpop.f32.mrf.mxu0
        %v642 = vadd.f32 0.0, %v641
        %v643 = vpop.f32.mrf.mxu0
        %v644 = vadd.f32 0.0, %v643
        %645 = vmatprep.mubr.f32.mxu0 %v284
        %646 = vmatmul.mubr.f32.gmra.mxu0 %v283
        %v647 = vpop.f32.mrf.mxu0
        %v648 = vadd.f32 0.0, %v647
        %v649 = vpop.f32.mrf.mxu0
        %v650 = vadd.f32 0.0, %v649
        %651 = vmatprep.mubr.f32.mxu0 %v286
        %652 = vmatmul.mubr.f32.gmra.mxu0 %v285
        %v653 = vpop.f32.mrf.mxu0
        %v654 = vadd.f32 0.0, %v653
        %v655 = vpop.f32.mrf.mxu0
        %v656 = vadd.f32 0.0, %v655
        %657 = vmatprep.mubr.f32.mxu0 %v288
        %658 = vmatmul.mubr.f32.gmra.mxu0 %v287
        %v659 = vpop.f32.mrf.mxu0
        %v660 = vadd.f32 0.0, %v659
        %v661 = vpop.f32.mrf.mxu0
        %v662 = vadd.f32 0.0, %v661
        %663 = vmatprep.mubr.f32.mxu0 %v290
        %664 = vmatmul.mubr.f32.gmra.mxu0 %v289
        %v665 = vpop.f32.mrf.mxu0
        %v666 = vadd.f32 0.0, %v665
        %v667 = vpop.f32.mrf.mxu0
        %v668 = vadd.f32 0.0, %v667
        %669 = vmatprep.mubr.f32.mxu0 %v292
        %670 = vmatmul.mubr.f32.gmra.mxu0 %v291
        %v671 = vpop.f32.mrf.mxu0
        %v672 = vadd.f32 0.0, %v671
        %v673 = vpop.f32.mrf.mxu0
        %v674 = vadd.f32 0.0, %v673
        %675 = vmatprep.mubr.f32.mxu0 %v294
        %676 = vmatmul.mubr.f32.gmra.mxu0 %v293
        %v677 = vpop.f32.mrf.mxu0
        %v678 = vadd.f32 0.0, %v677
        %v679 = vpop.f32.mrf.mxu0
        %v680 = vadd.f32 0.0, %v679
        %681 = vmatprep.mubr.f32.mxu0 %v296
        %682 = vmatmul.mubr.f32.gmra.mxu0 %v295
        %v683 = vpop.f32.mrf.mxu0
        %v684 = vadd.f32 0.0, %v683
        %v685 = vpop.f32.mrf.mxu0
        %v686 = vadd.f32 0.0, %v685
        %687 = vmatprep.mubr.f32.mxu0 %v298
        %688 = vmatmul.mubr.f32.gmra.mxu0 %v297
        %v689 = vpop.f32.mrf.mxu0
        %v690 = vadd.f32 0.0, %v689
        %v691 = vpop.f32.mrf.mxu0
        %v692 = vadd.f32 0.0, %v691
        %693 = vmatprep.mubr.f32.mxu0 %v300
        %694 = vmatmul.mubr.f32.gmra.mxu0 %v299
        %v695 = vpop.f32.mrf.mxu0
        %v696 = vadd.f32 0.0, %v695
        %v697 = vpop.f32.mrf.mxu0
        %v698 = vadd.f32 0.0, %v697
        %699 = vmatprep.mubr.f32.mxu0 %v302
        %700 = vmatmul.mubr.f32.gmra.mxu0 %v301
        %v701 = vpop.f32.mrf.mxu0
        %v702 = vadd.f32 0.0, %v701
        %v703 = vpop.f32.mrf.mxu0
        %v704 = vadd.f32 0.0, %v703
        %705 = vmatprep.mubr.f32.mxu0 %v304
        %706 = vmatmul.mubr.f32.gmra.mxu0 %v303
        %v707 = vpop.f32.mrf.mxu0
        %v708 = vadd.f32 0.0, %v707
        %v709 = vpop.f32.mrf.mxu0
        %v710 = vadd.f32 0.0, %v709
        %711 = vmatprep.mubr.f32.mxu0 %v306
        %712 = vmatmul.mubr.f32.gmra.mxu0 %v305
        %v713 = vpop.f32.mrf.mxu0
        %v714 = vadd.f32 0.0, %v713
        %v715 = vpop.f32.mrf.mxu0
        %v716 = vadd.f32 0.0, %v715
        %717 = vmatprep.mubr.f32.mxu0 %v308
        %718 = vmatmul.mubr.f32.gmra.mxu0 %v307
        %v719 = vpop.f32.mrf.mxu0
        %v720 = vadd.f32 0.0, %v719
        %v721 = vpop.f32.mrf.mxu0
        %v722 = vadd.f32 0.0, %v721
        %723 = vmatprep.mubr.f32.mxu0 %v310
        %724 = vmatmul.mubr.f32.gmra.mxu0 %v309
        %v725 = vpop.f32.mrf.mxu0
        %v726 = vadd.f32 0.0, %v725
        %v727 = vpop.f32.mrf.mxu0
        %v728 = vadd.f32 0.0, %v727
        %729 = vdwg.mxu0
        %v730 = vmul.f32 %v409, 2.0
        %v731 = vmul.f32 %v411, 2.0
        %v732 = vmul.f32 %v413, 2.0
        %v733 = vmul.f32 %v415, 2.0
        %v734 = vmul.f32 %v417, 2.0
        %v735 = vmul.f32 %v419, 2.0
        %v736 = vmul.f32 %v421, 2.0
        %v737 = vmul.f32 %v423, 2.0
        %v738 = vmul.f32 %v425, 2.0
        %v739 = vmul.f32 %v427, 2.0
        %v740 = vmul.f32 %v429, 2.0
        %v741 = vmul.f32 %v431, 2.0
        %v742 = vmul.f32 %v433, 2.0
        %v743 = vmul.f32 %v435, 2.0
        %v744 = vmul.f32 %v437, 2.0
        %v745 = vmul.f32 %v439, 2.0
        %v746 = vmul.f32 %v441, 2.0
        %v747 = vmul.f32 %v443, 2.0
        %v748 = vmul.f32 %v445, 2.0
        %v749 = vmul.f32 %v447, 2.0
        %v750 = vmul.f32 %v449, 2.0
        %v751 = vmul.f32 %v451, 2.0
        %v752 = vmul.f32 %v453, 2.0
        %v753 = vmul.f32 %v455, 2.0
        %v754 = vmul.f32 %v457, 2.0
        %v755 = vmul.f32 %v459, 2.0
        %v756 = vmul.f32 %v461, 2.0
        %v757 = vmul.f32 %v463, 2.0
        %v758 = vmul.f32 %v465, 2.0
        %v759 = vmul.f32 %v467, 2.0
        %v760 = vmul.f32 %v469, 2.0
        %v761 = vmul.f32 %v471, 2.0
        %v762 = vsub.f32 %v730, %v540
        %v763 = vsub.f32 %v731, %v546
        %v764 = vsub.f32 %v732, %v552
        %v765 = vsub.f32 %v733, %v558
        %v766 = vsub.f32 %v734, %v564
        %v767 = vsub.f32 %v735, %v570
        %v768 = vsub.f32 %v736, %v576
        %v769 = vsub.f32 %v737, %v582
        %v770 = vsub.f32 %v738, %v588
        %v771 = vsub.f32 %v739, %v594
        %v772 = vsub.f32 %v740, %v600
        %v773 = vsub.f32 %v741, %v606
        %v774 = vsub.f32 %v742, %v612
        %v775 = vsub.f32 %v743, %v618
        %v776 = vsub.f32 %v744, %v624
        %v777 = vsub.f32 %v745, %v630
        %v778 = vsub.f32 %v746, %v636
        %v779 = vsub.f32 %v747, %v642
        %v780 = vsub.f32 %v748, %v648
        %v781 = vsub.f32 %v749, %v654
        %v782 = vsub.f32 %v750, %v660
        %v783 = vsub.f32 %v751, %v666
        %v784 = vsub.f32 %v752, %v672
        %v785 = vsub.f32 %v753, %v678
        %v786 = vsub.f32 %v754, %v684
        %v787 = vsub.f32 %v755, %v690
        %v788 = vsub.f32 %v756, %v696
        %v789 = vsub.f32 %v757, %v702
        %v790 = vsub.f32 %v758, %v708
        %v791 = vsub.f32 %v759, %v714
        %v792 = vsub.f32 %v760, %v720
        %v793 = vsub.f32 %v761, %v726
        %s794 = sld [smem:[#allocation3 + $0x2]]
        %v795 = vstv %s794
        %v796 = vmul.f32 %v795, %v762
        %v797 = vmul.f32 %v795, %v763
        %v798 = vmul.f32 %v795, %v764
        %v799 = vmul.f32 %v795, %v765
        %v800 = vmul.f32 %v795, %v766
        %v801 = vmul.f32 %v795, %v767
        %v802 = vmul.f32 %v795, %v768
        %v803 = vmul.f32 %v795, %v769
        %v804 = vmul.f32 %v795, %v770
        %v805 = vmul.f32 %v795, %v771
        %v806 = vmul.f32 %v795, %v772
        %v807 = vmul.f32 %v795, %v773
        %v808 = vmul.f32 %v795, %v774
        %v809 = vmul.f32 %v795, %v775
        %v810 = vmul.f32 %v795, %v776
        %v811 = vmul.f32 %v795, %v777
        %v812 = vmul.f32 %v795, %v778
        %v813 = vmul.f32 %v795, %v779
        %v814 = vmul.f32 %v795, %v780
        %v815 = vmul.f32 %v795, %v781
        %v816 = vmul.f32 %v795, %v782
        %v817 = vmul.f32 %v795, %v783
        %v818 = vmul.f32 %v795, %v784
        %v819 = vmul.f32 %v795, %v785
        %v820 = vmul.f32 %v795, %v786
        %v821 = vmul.f32 %v795, %v787
        %v822 = vmul.f32 %v795, %v788
        %v823 = vmul.f32 %v795, %v789
        %v824 = vmul.f32 %v795, %v790
        %v825 = vmul.f32 %v795, %v791
        %v826 = vmul.f32 %v795, %v792
        %v827 = vmul.f32 %v795, %v793
        %v828 = vadd.f32 %v542, %v796
        %v829 = vadd.f32 %v548, %v797
        %v830 = vadd.f32 %v554, %v798
        %v831 = vadd.f32 %v560, %v799
        %v832 = vadd.f32 %v566, %v800
        %v833 = vadd.f32 %v572, %v801
        %v834 = vadd.f32 %v578, %v802
        %v835 = vadd.f32 %v584, %v803
        %v836 = vadd.f32 %v590, %v804
        %v837 = vadd.f32 %v596, %v805
        %v838 = vadd.f32 %v602, %v806
        %v839 = vadd.f32 %v608, %v807
        %v840 = vadd.f32 %v614, %v808
        %v841 = vadd.f32 %v620, %v809
        %v842 = vadd.f32 %v626, %v810
        %v843 = vadd.f32 %v632, %v811
        %v844 = vadd.f32 %v638, %v812
        %v845 = vadd.f32 %v644, %v813
        %v846 = vadd.f32 %v650, %v814
        %v847 = vadd.f32 %v656, %v815
        %v848 = vadd.f32 %v662, %v816
        %v849 = vadd.f32 %v668, %v817
        %v850 = vadd.f32 %v674, %v818
        %v851 = vadd.f32 %v680, %v819
        %v852 = vadd.f32 %v686, %v820
        %v853 = vadd.f32 %v692, %v821
        %v854 = vadd.f32 %v698, %v822
        %v855 = vadd.f32 %v704, %v823
        %v856 = vadd.f32 %v710, %v824
        %v857 = vadd.f32 %v716, %v825
        %v858 = vadd.f32 %v722, %v826
        %v859 = vadd.f32 %v728, %v827
        %860 = vst [vmem:[#allocation2] sm:$0xff] %v762
        %861 = vst [vmem:[#allocation2 + $0x10] sm:$0xff] %v763
        %862 = vst [vmem:[#allocation2 + $0x20] sm:$0xff] %v764
        %863 = vst [vmem:[#allocation2 + $0x30] sm:$0xff] %v765
        %864 = vst [vmem:[#allocation2 + $0x40] sm:$0xff] %v766
        %865 = vst [vmem:[#allocation2 + $0x50] sm:$0xff] %v767
        %866 = vst [vmem:[#allocation2 + $0x60] sm:$0xff] %v768
        %867 = vst [vmem:[#allocation2 + $0x70] sm:$0xff] %v769
        %868 = vst [vmem:[#allocation2 + $0x80] sm:$0xff] %v770
        %869 = vst [vmem:[#allocation2 + $0x90] sm:$0xff] %v771
        %870 = vst [vmem:[#allocation2 + $0xa0] sm:$0xff] %v772
        %871 = vst [vmem:[#allocation2 + $0xb0] sm:$0xff] %v773
        %872 = vst [vmem:[#allocation2 + $0xc0] sm:$0xff] %v774
        %873 = vst [vmem:[#allocation2 + $0xd0] sm:$0xff] %v775
        %874 = vst [vmem:[#allocation2 + $0xe0] sm:$0xff] %v776
        %875 = vst [vmem:[#allocation2 + $0xf0] sm:$0xff] %v777
        %876 = vst [vmem:[#allocation2 + $0x100] sm:$0xff] %v778
        %877 = vst [vmem:[#allocation2 + $0x110] sm:$0xff] %v779
        %878 = vst [vmem:[#allocation2 + $0x120] sm:$0xff] %v780
        %879 = vst [vmem:[#allocation2 + $0x130] sm:$0xff] %v781
        %880 = vst [vmem:[#allocation2 + $0x140] sm:$0xff] %v782
        %881 = vst [vmem:[#allocation2 + $0x150] sm:$0xff] %v783
        %882 = vst [vmem:[#allocation2 + $0x160] sm:$0xff] %v784
        %883 = vst [vmem:[#allocation2 + $0x170] sm:$0xff] %v785
        %884 = vst [vmem:[#allocation2 + $0x180] sm:$0xff] %v786
        %885 = vst [vmem:[#allocation2 + $0x190] sm:$0xff] %v787
        %886 = vst [vmem:[#allocation2 + $0x1a0] sm:$0xff] %v788
        %887 = vst [vmem:[#allocation2 + $0x1b0] sm:$0xff] %v789
        %888 = vst [vmem:[#allocation2 + $0x1c0] sm:$0xff] %v790
        %889 = vst [vmem:[#allocation2 + $0x1d0] sm:$0xff] %v791
        %890 = vst [vmem:[#allocation2 + $0x1e0] sm:$0xff] %v792
        %891 = vst [vmem:[#allocation2 + $0x1f0] sm:$0xff] %v793
        %892 = vst [vmem:[#allocation2 + $0x8] sm:$0xff] %v828
        %893 = vst [vmem:[#allocation2 + $0x18] sm:$0xff] %v829
        %894 = vst [vmem:[#allocation2 + $0x28] sm:$0xff] %v830
        %895 = vst [vmem:[#allocation2 + $0x38] sm:$0xff] %v831
        %896 = vst [vmem:[#allocation2 + $0x48] sm:$0xff] %v832
        %897 = vst [vmem:[#allocation2 + $0x58] sm:$0xff] %v833
        %898 = vst [vmem:[#allocation2 + $0x68] sm:$0xff] %v834
        %899 = vst [vmem:[#allocation2 + $0x78] sm:$0xff] %v835
        %900 = vst [vmem:[#allocation2 + $0x88] sm:$0xff] %v836
        %901 = vst [vmem:[#allocation2 + $0x98] sm:$0xff] %v837
        %902 = vst [vmem:[#allocation2 + $0xa8] sm:$0xff] %v838
        %903 = vst [vmem:[#allocation2 + $0xb8] sm:$0xff] %v839
        %904 = vst [vmem:[#allocation2 + $0xc8] sm:$0xff] %v840
        %905 = vst [vmem:[#allocation2 + $0xd8] sm:$0xff] %v841
        %906 = vst [vmem:[#allocation2 + $0xe8] sm:$0xff] %v842
        %907 = vst [vmem:[#allocation2 + $0xf8] sm:$0xff] %v843
        %908 = vst [vmem:[#allocation2 + $0x108] sm:$0xff] %v844
        %909 = vst [vmem:[#allocation2 + $0x118] sm:$0xff] %v845
        %910 = vst [vmem:[#allocation2 + $0x128] sm:$0xff] %v846
        %911 = vst [vmem:[#allocation2 + $0x138] sm:$0xff] %v847
        %912 = vst [vmem:[#allocation2 + $0x148] sm:$0xff] %v848
        %913 = vst [vmem:[#allocation2 + $0x158] sm:$0xff] %v849
        %914 = vst [vmem:[#allocation2 + $0x168] sm:$0xff] %v850
        %915 = vst [vmem:[#allocation2 + $0x178] sm:$0xff] %v851
        %916 = vst [vmem:[#allocation2 + $0x188] sm:$0xff] %v852
        %917 = vst [vmem:[#allocation2 + $0x198] sm:$0xff] %v853
        %918 = vst [vmem:[#allocation2 + $0x1a8] sm:$0xff] %v854
        %919 = vst [vmem:[#allocation2 + $0x1b8] sm:$0xff] %v855
        %920 = vst [vmem:[#allocation2 + $0x1c8] sm:$0xff] %v856
        %921 = vst [vmem:[#allocation2 + $0x1d8] sm:$0xff] %v857
        %922 = vst [vmem:[#allocation2 + $0x1e8] sm:$0xff] %v858
        %923 = vst [vmem:[#allocation2 + $0x1f8] sm:$0xff] %v859
        %v924 = vld [vmem:[#allocation2] sm:$0xff]
        %v925 = vld [vmem:[#allocation2 + $0x8] sm:$0xff]
        %v926 = vld [vmem:[#allocation2 + $0x10] sm:$0xff]
        %v927 = vld [vmem:[#allocation2 + $0x18] sm:$0xff]
        %v928 = vld [vmem:[#allocation2 + $0x20] sm:$0xff]
        %v929 = vld [vmem:[#allocation2 + $0x28] sm:$0xff]
        %v930 = vld [vmem:[#allocation2 + $0x30] sm:$0xff]
        %v931 = vld [vmem:[#allocation2 + $0x38] sm:$0xff]
        %v932 = vld [vmem:[#allocation2 + $0x40] sm:$0xff]
        %v933 = vld [vmem:[#allocation2 + $0x48] sm:$0xff]
        %v934 = vld [vmem:[#allocation2 + $0x50] sm:$0xff]
        %v935 = vld [vmem:[#allocation2 + $0x58] sm:$0xff]
        %v936 = vld [vmem:[#allocation2 + $0x60] sm:$0xff]
        %v937 = vld [vmem:[#allocation2 + $0x68] sm:$0xff]
        %v938 = vld [vmem:[#allocation2 + $0x70] sm:$0xff]
        %v939 = vld [vmem:[#allocation2 + $0x78] sm:$0xff]
        %v940 = vld [vmem:[#allocation2 + $0x80] sm:$0xff]
        %v941 = vld [vmem:[#allocation2 + $0x88] sm:$0xff]
        %v942 = vld [vmem:[#allocation2 + $0x90] sm:$0xff]
        %v943 = vld [vmem:[#allocation2 + $0x98] sm:$0xff]
        %v944 = vld [vmem:[#allocation2 + $0xa0] sm:$0xff]
        %v945 = vld [vmem:[#allocation2 + $0xa8] sm:$0xff]
        %v946 = vld [vmem:[#allocation2 + $0xb0] sm:$0xff]
        %v947 = vld [vmem:[#allocation2 + $0xb8] sm:$0xff]
        %v948 = vld [vmem:[#allocation2 + $0xc0] sm:$0xff]
        %v949 = vld [vmem:[#allocation2 + $0xc8] sm:$0xff]
        %v950 = vld [vmem:[#allocation2 + $0xd0] sm:$0xff]
        %v951 = vld [vmem:[#allocation2 + $0xd8] sm:$0xff]
        %v952 = vld [vmem:[#allocation2 + $0xe0] sm:$0xff]
        %v953 = vld [vmem:[#allocation2 + $0xe8] sm:$0xff]
        %v954 = vld [vmem:[#allocation2 + $0xf0] sm:$0xff]
        %v955 = vld [vmem:[#allocation2 + $0xf8] sm:$0xff]
        %v956 = vld [vmem:[#allocation2 + $0x100] sm:$0xff]
        %v957 = vld [vmem:[#allocation2 + $0x108] sm:$0xff]
        %v958 = vld [vmem:[#allocation2 + $0x110] sm:$0xff]
        %v959 = vld [vmem:[#allocation2 + $0x118] sm:$0xff]
        %v960 = vld [vmem:[#allocation2 + $0x120] sm:$0xff]
        %v961 = vld [vmem:[#allocation2 + $0x128] sm:$0xff]
        %v962 = vld [vmem:[#allocation2 + $0x130] sm:$0xff]
        %v963 = vld [vmem:[#allocation2 + $0x138] sm:$0xff]
        %v964 = vld [vmem:[#allocation2 + $0x140] sm:$0xff]
        %v965 = vld [vmem:[#allocation2 + $0x148] sm:$0xff]
        %v966 = vld [vmem:[#allocation2 + $0x150] sm:$0xff]
        %v967 = vld [vmem:[#allocation2 + $0x158] sm:$0xff]
        %v968 = vld [vmem:[#allocation2 + $0x160] sm:$0xff]
        %v969 = vld [vmem:[#allocation2 + $0x168] sm:$0xff]
        %v970 = vld [vmem:[#allocation2 + $0x170] sm:$0xff]
        %v971 = vld [vmem:[#allocation2 + $0x178] sm:$0xff]
        %v972 = vld [vmem:[#allocation2 + $0x180] sm:$0xff]
        %v973 = vld [vmem:[#allocation2 + $0x188] sm:$0xff]
        %v974 = vld [vmem:[#allocation2 + $0x190] sm:$0xff]
        %v975 = vld [vmem:[#allocation2 + $0x198] sm:$0xff]
        %v976 = vld [vmem:[#allocation2 + $0x1a0] sm:$0xff]
        %v977 = vld [vmem:[#allocation2 + $0x1a8] sm:$0xff]
        %v978 = vld [vmem:[#allocation2 + $0x1b0] sm:$0xff]
        %v979 = vld [vmem:[#allocation2 + $0x1b8] sm:$0xff]
        %v980 = vld [vmem:[#allocation2 + $0x1c0] sm:$0xff]
        %v981 = vld [vmem:[#allocation2 + $0x1c8] sm:$0xff]
        %v982 = vld [vmem:[#allocation2 + $0x1d0] sm:$0xff]
        %v983 = vld [vmem:[#allocation2 + $0x1d8] sm:$0xff]
        %v984 = vld [vmem:[#allocation2 + $0x1e0] sm:$0xff]
        %v985 = vld [vmem:[#allocation2 + $0x1e8] sm:$0xff]
        %v986 = vld [vmem:[#allocation2 + $0x1f0] sm:$0xff]
        %v987 = vld [vmem:[#allocation2 + $0x1f8] sm:$0xff]
        %988 = vmatprep.subr.mxu0 %v955
        %989 = vmatpush1.msra.mxu0 %v954
        %990 = vmatprep.subr.mxu0 %v953
        %991 = vmatpush1.msra.mxu0 %v952
        %992 = vmatprep.subr.mxu0 %v951
        %993 = vmatpush1.msra.mxu0 %v950
        %994 = vmatprep.subr.mxu0 %v949
        %995 = vmatpush1.msra.mxu0 %v948
        %996 = vmatprep.subr.mxu0 %v947
        %997 = vmatpush1.msra.mxu0 %v946
        %998 = vmatprep.subr.mxu0 %v945
        %999 = vmatpush1.msra.mxu0 %v944
        %1000 = vmatprep.subr.mxu0 %v943
        %1001 = vmatpush1.msra.mxu0 %v942
        %1002 = vmatprep.subr.mxu0 %v941
        %1003 = vmatpush1.msra.mxu0 %v940
        %1004 = vmatprep.subr.mxu0 %v939
        %1005 = vmatpush1.msra.mxu0 %v938
        %1006 = vmatprep.subr.mxu0 %v937
        %1007 = vmatpush1.msra.mxu0 %v936
        %1008 = vmatprep.subr.mxu0 %v935
        %1009 = vmatpush1.msra.mxu0 %v934
        %1010 = vmatprep.subr.mxu0 %v933
        %1011 = vmatpush1.msra.mxu0 %v932
        %1012 = vmatprep.subr.mxu0 %v931
        %1013 = vmatpush1.msra.mxu0 %v930
        %1014 = vmatprep.subr.mxu0 %v929
        %1015 = vmatpush1.msra.mxu0 %v928
        %1016 = vmatprep.subr.mxu0 %v927
        %1017 = vmatpush1.msra.mxu0 %v926
        %1018 = vmatprep.subr.mxu0 %v925
        %1019 = vmatpush1.msra.mxu0 %v924
        %1020 = vmatprep.subr.mxu0 %v987
        %1021 = vmatpush2.msra.mxu0 %v986
        %1022 = vmatprep.subr.mxu0 %v985
        %1023 = vmatpush2.msra.mxu0 %v984
        %1024 = vmatprep.subr.mxu0 %v983
        %1025 = vmatpush2.msra.mxu0 %v982
        %1026 = vmatprep.subr.mxu0 %v981
        %1027 = vmatpush2.msra.mxu0 %v980
        %1028 = vmatprep.subr.mxu0 %v979
        %1029 = vmatpush2.msra.mxu0 %v978
        %1030 = vmatprep.subr.mxu0 %v977
        %1031 = vmatpush2.msra.mxu0 %v976
        %1032 = vmatprep.subr.mxu0 %v975
        %1033 = vmatpush2.msra.mxu0 %v974
        %1034 = vmatprep.subr.mxu0 %v973
        %1035 = vmatpush2.msra.mxu0 %v972
        %1036 = vmatprep.subr.mxu0 %v971
        %1037 = vmatpush2.msra.mxu0 %v970
        %1038 = vmatprep.subr.mxu0 %v969
        %1039 = vmatpush2.msra.mxu0 %v968
        %1040 = vmatprep.subr.mxu0 %v967
        %1041 = vmatpush2.msra.mxu0 %v966
        %1042 = vmatprep.subr.mxu0 %v965
        %1043 = vmatpush2.msra.mxu0 %v964
        %1044 = vmatprep.subr.mxu0 %v963
        %1045 = vmatpush2.msra.mxu0 %v962
        %1046 = vmatprep.subr.mxu0 %v961
        %1047 = vmatpush2.msra.mxu0 %v960
        %1048 = vmatprep.subr.mxu0 %v959
        %1049 = vmatpush2.msra.mxu0 %v958
        %1050 = vmatprep.subr.mxu0 %v957
        %1051 = vmatpush2.msra.mxu0 %v956
        %1052 = vmatprep.mubr.f32.mxu0 %v248
        %1053 = vmatmul.mubr.f32.gmra.mxu0 %v247
        %v1054 = vpop.f32.mrf.mxu0
        %v1055 = vadd.f32 0.0, %v1054
        %v1056 = vpop.f32.mrf.mxu0
        %v1057 = vadd.f32 0.0, %v1056
        %1058 = vmatprep.mubr.f32.mxu0 %v250
        %1059 = vmatmul.mubr.f32.gmra.mxu0 %v249
        %v1060 = vpop.f32.mrf.mxu0
        %v1061 = vadd.f32 0.0, %v1060
        %v1062 = vpop.f32.mrf.mxu0
        %v1063 = vadd.f32 0.0, %v1062
        %1064 = vmatprep.mubr.f32.mxu0 %v252
        %1065 = vmatmul.mubr.f32.gmra.mxu0 %v251
        %v1066 = vpop.f32.mrf.mxu0
        %v1067 = vadd.f32 0.0, %v1066
        %v1068 = vpop.f32.mrf.mxu0
        %v1069 = vadd.f32 0.0, %v1068
        %1070 = vmatprep.mubr.f32.mxu0 %v254
        %1071 = vmatmul.mubr.f32.gmra.mxu0 %v253
        %v1072 = vpop.f32.mrf.mxu0
        %v1073 = vadd.f32 0.0, %v1072
        %v1074 = vpop.f32.mrf.mxu0
        %v1075 = vadd.f32 0.0, %v1074
        %1076 = vmatprep.mubr.f32.mxu0 %v256
        %1077 = vmatmul.mubr.f32.gmra.mxu0 %v255
        %v1078 = vpop.f32.mrf.mxu0
        %v1079 = vadd.f32 0.0, %v1078
        %v1080 = vpop.f32.mrf.mxu0
        %v1081 = vadd.f32 0.0, %v1080
        %1082 = vmatprep.mubr.f32.mxu0 %v258
        %1083 = vmatmul.mubr.f32.gmra.mxu0 %v257
        %v1084 = vpop.f32.mrf.mxu0
        %v1085 = vadd.f32 0.0, %v1084
        %v1086 = vpop.f32.mrf.mxu0
        %v1087 = vadd.f32 0.0, %v1086
        %1088 = vmatprep.mubr.f32.mxu0 %v260
        %1089 = vmatmul.mubr.f32.gmra.mxu0 %v259
        %v1090 = vpop.f32.mrf.mxu0
        %v1091 = vadd.f32 0.0, %v1090
        %v1092 = vpop.f32.mrf.mxu0
        %v1093 = vadd.f32 0.0, %v1092
        %1094 = vmatprep.mubr.f32.mxu0 %v262
        %1095 = vmatmul.mubr.f32.gmra.mxu0 %v261
        %v1096 = vpop.f32.mrf.mxu0
        %v1097 = vadd.f32 0.0, %v1096
        %v1098 = vpop.f32.mrf.mxu0
        %v1099 = vadd.f32 0.0, %v1098
        %1100 = vmatprep.mubr.f32.mxu0 %v264
        %1101 = vmatmul.mubr.f32.gmra.mxu0 %v263
        %v1102 = vpop.f32.mrf.mxu0
        %v1103 = vadd.f32 0.0, %v1102
        %v1104 = vpop.f32.mrf.mxu0
        %v1105 = vadd.f32 0.0, %v1104
        %1106 = vmatprep.mubr.f32.mxu0 %v266
        %1107 = vmatmul.mubr.f32.gmra.mxu0 %v265
        %v1108 = vpop.f32.mrf.mxu0
        %v1109 = vadd.f32 0.0, %v1108
        %v1110 = vpop.f32.mrf.mxu0
        %v1111 = vadd.f32 0.0, %v1110
        %1112 = vmatprep.mubr.f32.mxu0 %v268
        %1113 = vmatmul.mubr.f32.gmra.mxu0 %v267
        %v1114 = vpop.f32.mrf.mxu0
        %v1115 = vadd.f32 0.0, %v1114
        %v1116 = vpop.f32.mrf.mxu0
        %v1117 = vadd.f32 0.0, %v1116
        %1118 = vmatprep.mubr.f32.mxu0 %v270
        %1119 = vmatmul.mubr.f32.gmra.mxu0 %v269
        %v1120 = vpop.f32.mrf.mxu0
        %v1121 = vadd.f32 0.0, %v1120
        %v1122 = vpop.f32.mrf.mxu0
        %v1123 = vadd.f32 0.0, %v1122
        %1124 = vmatprep.mubr.f32.mxu0 %v272
        %1125 = vmatmul.mubr.f32.gmra.mxu0 %v271
        %v1126 = vpop.f32.mrf.mxu0
        %v1127 = vadd.f32 0.0, %v1126
        %v1128 = vpop.f32.mrf.mxu0
        %v1129 = vadd.f32 0.0, %v1128
        %1130 = vmatprep.mubr.f32.mxu0 %v274
        %1131 = vmatmul.mubr.f32.gmra.mxu0 %v273
        %v1132 = vpop.f32.mrf.mxu0
        %v1133 = vadd.f32 0.0, %v1132
        %v1134 = vpop.f32.mrf.mxu0
        %v1135 = vadd.f32 0.0, %v1134
        %1136 = vmatprep.mubr.f32.mxu0 %v276
        %1137 = vmatmul.mubr.f32.gmra.mxu0 %v275
        %v1138 = vpop.f32.mrf.mxu0
        %v1139 = vadd.f32 0.0, %v1138
        %v1140 = vpop.f32.mrf.mxu0
        %v1141 = vadd.f32 0.0, %v1140
        %1142 = vmatprep.mubr.f32.mxu0 %v278
        %1143 = vmatmul.mubr.f32.gmra.mxu0 %v277
        %v1144 = vpop.f32.mrf.mxu0
        %v1145 = vadd.f32 0.0, %v1144
        %v1146 = vpop.f32.mrf.mxu0
        %v1147 = vadd.f32 0.0, %v1146
        %1148 = vmatprep.mubr.f32.mxu0 %v280
        %1149 = vmatmul.mubr.f32.gmra.mxu0 %v279
        %v1150 = vpop.f32.mrf.mxu0
        %v1151 = vadd.f32 0.0, %v1150
        %v1152 = vpop.f32.mrf.mxu0
        %v1153 = vadd.f32 0.0, %v1152
        %1154 = vmatprep.mubr.f32.mxu0 %v282
        %1155 = vmatmul.mubr.f32.gmra.mxu0 %v281
        %v1156 = vpop.f32.mrf.mxu0
        %v1157 = vadd.f32 0.0, %v1156
        %v1158 = vpop.f32.mrf.mxu0
        %v1159 = vadd.f32 0.0, %v1158
        %1160 = vmatprep.mubr.f32.mxu0 %v284
        %1161 = vmatmul.mubr.f32.gmra.mxu0 %v283
        %v1162 = vpop.f32.mrf.mxu0
        %v1163 = vadd.f32 0.0, %v1162
        %v1164 = vpop.f32.mrf.mxu0
        %v1165 = vadd.f32 0.0, %v1164
        %1166 = vmatprep.mubr.f32.mxu0 %v286
        %1167 = vmatmul.mubr.f32.gmra.mxu0 %v285
        %v1168 = vpop.f32.mrf.mxu0
        %v1169 = vadd.f32 0.0, %v1168
        %v1170 = vpop.f32.mrf.mxu0
        %v1171 = vadd.f32 0.0, %v1170
        %1172 = vmatprep.mubr.f32.mxu0 %v288
        %1173 = vmatmul.mubr.f32.gmra.mxu0 %v287
        %v1174 = vpop.f32.mrf.mxu0
        %v1175 = vadd.f32 0.0, %v1174
        %v1176 = vpop.f32.mrf.mxu0
        %v1177 = vadd.f32 0.0, %v1176
        %1178 = vmatprep.mubr.f32.mxu0 %v290
        %1179 = vmatmul.mubr.f32.gmra.mxu0 %v289
        %v1180 = vpop.f32.mrf.mxu0
        %v1181 = vadd.f32 0.0, %v1180
        %v1182 = vpop.f32.mrf.mxu0
        %v1183 = vadd.f32 0.0, %v1182
        %1184 = vmatprep.mubr.f32.mxu0 %v292
        %1185 = vmatmul.mubr.f32.gmra.mxu0 %v291
        %v1186 = vpop.f32.mrf.mxu0
        %v1187 = vadd.f32 0.0, %v1186
        %v1188 = vpop.f32.mrf.mxu0
        %v1189 = vadd.f32 0.0, %v1188
        %1190 = vmatprep.mubr.f32.mxu0 %v294
        %1191 = vmatmul.mubr.f32.gmra.mxu0 %v293
        %v1192 = vpop.f32.mrf.mxu0
        %v1193 = vadd.f32 0.0, %v1192
        %v1194 = vpop.f32.mrf.mxu0
        %v1195 = vadd.f32 0.0, %v1194
        %1196 = vmatprep.mubr.f32.mxu0 %v296
        %1197 = vmatmul.mubr.f32.gmra.mxu0 %v295
        %v1198 = vpop.f32.mrf.mxu0
        %v1199 = vadd.f32 0.0, %v1198
        %v1200 = vpop.f32.mrf.mxu0
        %v1201 = vadd.f32 0.0, %v1200
        %1202 = vmatprep.mubr.f32.mxu0 %v298
        %1203 = vmatmul.mubr.f32.gmra.mxu0 %v297
        %v1204 = vpop.f32.mrf.mxu0
        %v1205 = vadd.f32 0.0, %v1204
        %v1206 = vpop.f32.mrf.mxu0
        %v1207 = vadd.f32 0.0, %v1206
        %1208 = vmatprep.mubr.f32.mxu0 %v300
        %1209 = vmatmul.mubr.f32.gmra.mxu0 %v299
        %v1210 = vpop.f32.mrf.mxu0
        %v1211 = vadd.f32 0.0, %v1210
        %v1212 = vpop.f32.mrf.mxu0
        %v1213 = vadd.f32 0.0, %v1212
        %1214 = vmatprep.mubr.f32.mxu0 %v302
        %1215 = vmatmul.mubr.f32.gmra.mxu0 %v301
        %v1216 = vpop.f32.mrf.mxu0
        %v1217 = vadd.f32 0.0, %v1216
        %v1218 = vpop.f32.mrf.mxu0
        %v1219 = vadd.f32 0.0, %v1218
        %1220 = vmatprep.mubr.f32.mxu0 %v304
        %1221 = vmatmul.mubr.f32.gmra.mxu0 %v303
        %v1222 = vpop.f32.mrf.mxu0
        %v1223 = vadd.f32 0.0, %v1222
        %v1224 = vpop.f32.mrf.mxu0
        %v1225 = vadd.f32 0.0, %v1224
        %1226 = vmatprep.mubr.f32.mxu0 %v306
        %1227 = vmatmul.mubr.f32.gmra.mxu0 %v305
        %v1228 = vpop.f32.mrf.mxu0
        %v1229 = vadd.f32 0.0, %v1228
        %v1230 = vpop.f32.mrf.mxu0
        %v1231 = vadd.f32 0.0, %v1230
        %1232 = vmatprep.mubr.f32.mxu0 %v308
        %1233 = vmatmul.mubr.f32.gmra.mxu0 %v307
        %v1234 = vpop.f32.mrf.mxu0
        %v1235 = vadd.f32 0.0, %v1234
        %v1236 = vpop.f32.mrf.mxu0
        %v1237 = vadd.f32 0.0, %v1236
        %1238 = vmatprep.mubr.f32.mxu0 %v310
        %1239 = vmatmul.mubr.f32.gmra.mxu0 %v309
        %v1240 = vpop.f32.mrf.mxu0
        %v1241 = vadd.f32 0.0, %v1240
        %v1242 = vpop.f32.mrf.mxu0
        %v1243 = vadd.f32 0.0, %v1242
        %1244 = vdwg.mxu0
        %v1245 = vmul.f32 %v924, 2.0
        %v1246 = vmul.f32 %v926, 2.0
        %v1247 = vmul.f32 %v928, 2.0
        %v1248 = vmul.f32 %v930, 2.0
        %v1249 = vmul.f32 %v932, 2.0
        %v1250 = vmul.f32 %v934, 2.0
        %v1251 = vmul.f32 %v936, 2.0
        %v1252 = vmul.f32 %v938, 2.0
        %v1253 = vmul.f32 %v940, 2.0
        %v1254 = vmul.f32 %v942, 2.0
        %v1255 = vmul.f32 %v944, 2.0
        %v1256 = vmul.f32 %v946, 2.0
        %v1257 = vmul.f32 %v948, 2.0
        %v1258 = vmul.f32 %v950, 2.0
        %v1259 = vmul.f32 %v952, 2.0
        %v1260 = vmul.f32 %v954, 2.0
        %v1261 = vmul.f32 %v956, 2.0
        %v1262 = vmul.f32 %v958, 2.0
        %v1263 = vmul.f32 %v960, 2.0
        %v1264 = vmul.f32 %v962, 2.0
        %v1265 = vmul.f32 %v964, 2.0
        %v1266 = vmul.f32 %v966, 2.0
        %v1267 = vmul.f32 %v968, 2.0
        %v1268 = vmul.f32 %v970, 2.0
        %v1269 = vmul.f32 %v972, 2.0
        %v1270 = vmul.f32 %v974, 2.0
        %v1271 = vmul.f32 %v976, 2.0
        %v1272 = vmul.f32 %v978, 2.0
        %v1273 = vmul.f32 %v980, 2.0
        %v1274 = vmul.f32 %v982, 2.0
        %v1275 = vmul.f32 %v984, 2.0
        %v1276 = vmul.f32 %v986, 2.0
        %v1277 = vsub.f32 %v1245, %v1055
        %v1278 = vsub.f32 %v1246, %v1061
        %v1279 = vsub.f32 %v1247, %v1067
        %v1280 = vsub.f32 %v1248, %v1073
        %v1281 = vsub.f32 %v1249, %v1079
        %v1282 = vsub.f32 %v1250, %v1085
        %v1283 = vsub.f32 %v1251, %v1091
        %v1284 = vsub.f32 %v1252, %v1097
        %v1285 = vsub.f32 %v1253, %v1103
        %v1286 = vsub.f32 %v1254, %v1109
        %v1287 = vsub.f32 %v1255, %v1115
        %v1288 = vsub.f32 %v1256, %v1121
        %v1289 = vsub.f32 %v1257, %v1127
        %v1290 = vsub.f32 %v1258, %v1133
        %v1291 = vsub.f32 %v1259, %v1139
        %v1292 = vsub.f32 %v1260, %v1145
        %v1293 = vsub.f32 %v1261, %v1151
        %v1294 = vsub.f32 %v1262, %v1157
        %v1295 = vsub.f32 %v1263, %v1163
        %v1296 = vsub.f32 %v1264, %v1169
        %v1297 = vsub.f32 %v1265, %v1175
        %v1298 = vsub.f32 %v1266, %v1181
        %v1299 = vsub.f32 %v1267, %v1187
        %v1300 = vsub.f32 %v1268, %v1193
        %v1301 = vsub.f32 %v1269, %v1199
        %v1302 = vsub.f32 %v1270, %v1205
        %v1303 = vsub.f32 %v1271, %v1211
        %v1304 = vsub.f32 %v1272, %v1217
        %v1305 = vsub.f32 %v1273, %v1223
        %v1306 = vsub.f32 %v1274, %v1229
        %v1307 = vsub.f32 %v1275, %v1235
        %v1308 = vsub.f32 %v1276, %v1241
        %s1309 = sld [smem:[#allocation3 + $0x1]]
        %v1310 = vstv %s1309
        %v1311 = vmul.f32 %v1310, %v1277
        %v1312 = vmul.f32 %v1310, %v1278
        %v1313 = vmul.f32 %v1310, %v1279
        %v1314 = vmul.f32 %v1310, %v1280
        %v1315 = vmul.f32 %v1310, %v1281
        %v1316 = vmul.f32 %v1310, %v1282
        %v1317 = vmul.f32 %v1310, %v1283
        %v1318 = vmul.f32 %v1310, %v1284
        %v1319 = vmul.f32 %v1310, %v1285
        %v1320 = vmul.f32 %v1310, %v1286
        %v1321 = vmul.f32 %v1310, %v1287
        %v1322 = vmul.f32 %v1310, %v1288
        %v1323 = vmul.f32 %v1310, %v1289
        %v1324 = vmul.f32 %v1310, %v1290
        %v1325 = vmul.f32 %v1310, %v1291
        %v1326 = vmul.f32 %v1310, %v1292
        %v1327 = vmul.f32 %v1310, %v1293
        %v1328 = vmul.f32 %v1310, %v1294
        %v1329 = vmul.f32 %v1310, %v1295
        %v1330 = vmul.f32 %v1310, %v1296
        %v1331 = vmul.f32 %v1310, %v1297
        %v1332 = vmul.f32 %v1310, %v1298
        %v1333 = vmul.f32 %v1310, %v1299
        %v1334 = vmul.f32 %v1310, %v1300
        %v1335 = vmul.f32 %v1310, %v1301
        %v1336 = vmul.f32 %v1310, %v1302
        %v1337 = vmul.f32 %v1310, %v1303
        %v1338 = vmul.f32 %v1310, %v1304
        %v1339 = vmul.f32 %v1310, %v1305
        %v1340 = vmul.f32 %v1310, %v1306
        %v1341 = vmul.f32 %v1310, %v1307
        %v1342 = vmul.f32 %v1310, %v1308
        %v1343 = vadd.f32 %v1057, %v1311
        %v1344 = vadd.f32 %v1063, %v1312
        %v1345 = vadd.f32 %v1069, %v1313
        %v1346 = vadd.f32 %v1075, %v1314
        %v1347 = vadd.f32 %v1081, %v1315
        %v1348 = vadd.f32 %v1087, %v1316
        %v1349 = vadd.f32 %v1093, %v1317
        %v1350 = vadd.f32 %v1099, %v1318
        %v1351 = vadd.f32 %v1105, %v1319
        %v1352 = vadd.f32 %v1111, %v1320
        %v1353 = vadd.f32 %v1117, %v1321
        %v1354 = vadd.f32 %v1123, %v1322
        %v1355 = vadd.f32 %v1129, %v1323
        %v1356 = vadd.f32 %v1135, %v1324
        %v1357 = vadd.f32 %v1141, %v1325
        %v1358 = vadd.f32 %v1147, %v1326
        %v1359 = vadd.f32 %v1153, %v1327
        %v1360 = vadd.f32 %v1159, %v1328
        %v1361 = vadd.f32 %v1165, %v1329
        %v1362 = vadd.f32 %v1171, %v1330
        %v1363 = vadd.f32 %v1177, %v1331
        %v1364 = vadd.f32 %v1183, %v1332
        %v1365 = vadd.f32 %v1189, %v1333
        %v1366 = vadd.f32 %v1195, %v1334
        %v1367 = vadd.f32 %v1201, %v1335
        %v1368 = vadd.f32 %v1207, %v1336
        %v1369 = vadd.f32 %v1213, %v1337
        %v1370 = vadd.f32 %v1219, %v1338
        %v1371 = vadd.f32 %v1225, %v1339
        %v1372 = vadd.f32 %v1231, %v1340
        %v1373 = vadd.f32 %v1237, %v1341
        %v1374 = vadd.f32 %v1243, %v1342
        %1375 = vst [vmem:[#allocation2] sm:$0xff] %v1277
        %1376 = vst [vmem:[#allocation2 + $0x10] sm:$0xff] %v1278
        %1377 = vst [vmem:[#allocation2 + $0x20] sm:$0xff] %v1279
        %1378 = vst [vmem:[#allocation2 + $0x30] sm:$0xff] %v1280
        %1379 = vst [vmem:[#allocation2 + $0x40] sm:$0xff] %v1281
        %1380 = vst [vmem:[#allocation2 + $0x50] sm:$0xff] %v1282
        %1381 = vst [vmem:[#allocation2 + $0x60] sm:$0xff] %v1283
        %1382 = vst [vmem:[#allocation2 + $0x70] sm:$0xff] %v1284
        %1383 = vst [vmem:[#allocation2 + $0x80] sm:$0xff] %v1285
        %1384 = vst [vmem:[#allocation2 + $0x90] sm:$0xff] %v1286
        %1385 = vst [vmem:[#allocation2 + $0xa0] sm:$0xff] %v1287
        %1386 = vst [vmem:[#allocation2 + $0xb0] sm:$0xff] %v1288
        %1387 = vst [vmem:[#allocation2 + $0xc0] sm:$0xff] %v1289
        %1388 = vst [vmem:[#allocation2 + $0xd0] sm:$0xff] %v1290
        %1389 = vst [vmem:[#allocation2 + $0xe0] sm:$0xff] %v1291
        %1390 = vst [vmem:[#allocation2 + $0xf0] sm:$0xff] %v1292
        %1391 = vst [vmem:[#allocation2 + $0x100] sm:$0xff] %v1293
        %1392 = vst [vmem:[#allocation2 + $0x110] sm:$0xff] %v1294
        %1393 = vst [vmem:[#allocation2 + $0x120] sm:$0xff] %v1295
        %1394 = vst [vmem:[#allocation2 + $0x130] sm:$0xff] %v1296
        %1395 = vst [vmem:[#allocation2 + $0x140] sm:$0xff] %v1297
        %1396 = vst [vmem:[#allocation2 + $0x150] sm:$0xff] %v1298
        %1397 = vst [vmem:[#allocation2 + $0x160] sm:$0xff] %v1299
        %1398 = vst [vmem:[#allocation2 + $0x170] sm:$0xff] %v1300
        %1399 = vst [vmem:[#allocation2 + $0x180] sm:$0xff] %v1301
        %1400 = vst [vmem:[#allocation2 + $0x190] sm:$0xff] %v1302
        %1401 = vst [vmem:[#allocation2 + $0x1a0] sm:$0xff] %v1303
        %1402 = vst [vmem:[#allocation2 + $0x1b0] sm:$0xff] %v1304
        %1403 = vst [vmem:[#allocation2 + $0x1c0] sm:$0xff] %v1305
        %1404 = vst [vmem:[#allocation2 + $0x1d0] sm:$0xff] %v1306
        %1405 = vst [vmem:[#allocation2 + $0x1e0] sm:$0xff] %v1307
        %1406 = vst [vmem:[#allocation2 + $0x1f0] sm:$0xff] %v1308
        %1407 = vst [vmem:[#allocation2 + $0x8] sm:$0xff] %v1343
        %1408 = vst [vmem:[#allocation2 + $0x18] sm:$0xff] %v1344
        %1409 = vst [vmem:[#allocation2 + $0x28] sm:$0xff] %v1345
        %1410 = vst [vmem:[#allocation2 + $0x38] sm:$0xff] %v1346
        %1411 = vst [vmem:[#allocation2 + $0x48] sm:$0xff] %v1347
        %1412 = vst [vmem:[#allocation2 + $0x58] sm:$0xff] %v1348
        %1413 = vst [vmem:[#allocation2 + $0x68] sm:$0xff] %v1349
        %1414 = vst [vmem:[#allocation2 + $0x78] sm:$0xff] %v1350
        %1415 = vst [vmem:[#allocation2 + $0x88] sm:$0xff] %v1351
        %1416 = vst [vmem:[#allocation2 + $0x98] sm:$0xff] %v1352
        %1417 = vst [vmem:[#allocation2 + $0xa8] sm:$0xff] %v1353
        %1418 = vst [vmem:[#allocation2 + $0xb8] sm:$0xff] %v1354
        %1419 = vst [vmem:[#allocation2 + $0xc8] sm:$0xff] %v1355
        %1420 = vst [vmem:[#allocation2 + $0xd8] sm:$0xff] %v1356
        %1421 = vst [vmem:[#allocation2 + $0xe8] sm:$0xff] %v1357
        %1422 = vst [vmem:[#allocation2 + $0xf8] sm:$0xff] %v1358
        %1423 = vst [vmem:[#allocation2 + $0x108] sm:$0xff] %v1359
        %1424 = vst [vmem:[#allocation2 + $0x118] sm:$0xff] %v1360
        %1425 = vst [vmem:[#allocation2 + $0x128] sm:$0xff] %v1361
        %1426 = vst [vmem:[#allocation2 + $0x138] sm:$0xff] %v1362
        %1427 = vst [vmem:[#allocation2 + $0x148] sm:$0xff] %v1363
        %1428 = vst [vmem:[#allocation2 + $0x158] sm:$0xff] %v1364
        %1429 = vst [vmem:[#allocation2 + $0x168] sm:$0xff] %v1365
        %1430 = vst [vmem:[#allocation2 + $0x178] sm:$0xff] %v1366
        %1431 = vst [vmem:[#allocation2 + $0x188] sm:$0xff] %v1367
        %1432 = vst [vmem:[#allocation2 + $0x198] sm:$0xff] %v1368
        %1433 = vst [vmem:[#allocation2 + $0x1a8] sm:$0xff] %v1369
        %1434 = vst [vmem:[#allocation2 + $0x1b8] sm:$0xff] %v1370
        %1435 = vst [vmem:[#allocation2 + $0x1c8] sm:$0xff] %v1371
        %1436 = vst [vmem:[#allocation2 + $0x1d8] sm:$0xff] %v1372
        %1437 = vst [vmem:[#allocation2 + $0x1e8] sm:$0xff] %v1373
        %1438 = vst [vmem:[#allocation2 + $0x1f8] sm:$0xff] %v1374
        %v1439 = vld [vmem:[#allocation2] sm:$0xff]
        %v1440 = vld [vmem:[#allocation2 + $0x8] sm:$0xff]
        %v1441 = vld [vmem:[#allocation2 + $0x10] sm:$0xff]
        %v1442 = vld [vmem:[#allocation2 + $0x18] sm:$0xff]
        %v1443 = vld [vmem:[#allocation2 + $0x20] sm:$0xff]
        %v1444 = vld [vmem:[#allocation2 + $0x28] sm:$0xff]
        %v1445 = vld [vmem:[#allocation2 + $0x30] sm:$0xff]
        %v1446 = vld [vmem:[#allocation2 + $0x38] sm:$0xff]
        %v1447 = vld [vmem:[#allocation2 + $0x40] sm:$0xff]
        %v1448 = vld [vmem:[#allocation2 + $0x48] sm:$0xff]
        %v1449 = vld [vmem:[#allocation2 + $0x50] sm:$0xff]
        %v1450 = vld [vmem:[#allocation2 + $0x58] sm:$0xff]
        %v1451 = vld [vmem:[#allocation2 + $0x60] sm:$0xff]
        %v1452 = vld [vmem:[#allocation2 + $0x68] sm:$0xff]
        %v1453 = vld [vmem:[#allocation2 + $0x70] sm:$0xff]
        %v1454 = vld [vmem:[#allocation2 + $0x78] sm:$0xff]
        %v1455 = vld [vmem:[#allocation2 + $0x80] sm:$0xff]
        %v1456 = vld [vmem:[#allocation2 + $0x88] sm:$0xff]
        %v1457 = vld [vmem:[#allocation2 + $0x90] sm:$0xff]
        %v1458 = vld [vmem:[#allocation2 + $0x98] sm:$0xff]
        %v1459 = vld [vmem:[#allocation2 + $0xa0] sm:$0xff]
        %v1460 = vld [vmem:[#allocation2 + $0xa8] sm:$0xff]
        %v1461 = vld [vmem:[#allocation2 + $0xb0] sm:$0xff]
        %v1462 = vld [vmem:[#allocation2 + $0xb8] sm:$0xff]
        %v1463 = vld [vmem:[#allocation2 + $0xc0] sm:$0xff]
        %v1464 = vld [vmem:[#allocation2 + $0xc8] sm:$0xff]
        %v1465 = vld [vmem:[#allocation2 + $0xd0] sm:$0xff]
        %v1466 = vld [vmem:[#allocation2 + $0xd8] sm:$0xff]
        %v1467 = vld [vmem:[#allocation2 + $0xe0] sm:$0xff]
        %v1468 = vld [vmem:[#allocation2 + $0xe8] sm:$0xff]
        %v1469 = vld [vmem:[#allocation2 + $0xf0] sm:$0xff]
        %v1470 = vld [vmem:[#allocation2 + $0xf8] sm:$0xff]
        %v1471 = vld [vmem:[#allocation2 + $0x100] sm:$0xff]
        %v1472 = vld [vmem:[#allocation2 + $0x108] sm:$0xff]
        %v1473 = vld [vmem:[#allocation2 + $0x110] sm:$0xff]
        %v1474 = vld [vmem:[#allocation2 + $0x118] sm:$0xff]
        %v1475 = vld [vmem:[#allocation2 + $0x120] sm:$0xff]
        %v1476 = vld [vmem:[#allocation2 + $0x128] sm:$0xff]
        %v1477 = vld [vmem:[#allocation2 + $0x130] sm:$0xff]
        %v1478 = vld [vmem:[#allocation2 + $0x138] sm:$0xff]
        %v1479 = vld [vmem:[#allocation2 + $0x140] sm:$0xff]
        %v1480 = vld [vmem:[#allocation2 + $0x148] sm:$0xff]
        %v1481 = vld [vmem:[#allocation2 + $0x150] sm:$0xff]
        %v1482 = vld [vmem:[#allocation2 + $0x158] sm:$0xff]
        %v1483 = vld [vmem:[#allocation2 + $0x160] sm:$0xff]
        %v1484 = vld [vmem:[#allocation2 + $0x168] sm:$0xff]
        %v1485 = vld [vmem:[#allocation2 + $0x170] sm:$0xff]
        %v1486 = vld [vmem:[#allocation2 + $0x178] sm:$0xff]
        %v1487 = vld [vmem:[#allocation2 + $0x180] sm:$0xff]
        %v1488 = vld [vmem:[#allocation2 + $0x188] sm:$0xff]
        %v1489 = vld [vmem:[#allocation2 + $0x190] sm:$0xff]
        %v1490 = vld [vmem:[#allocation2 + $0x198] sm:$0xff]
        %v1491 = vld [vmem:[#allocation2 + $0x1a0] sm:$0xff]
        %v1492 = vld [vmem:[#allocation2 + $0x1a8] sm:$0xff]
        %v1493 = vld [vmem:[#allocation2 + $0x1b0] sm:$0xff]
        %v1494 = vld [vmem:[#allocation2 + $0x1b8] sm:$0xff]
        %v1495 = vld [vmem:[#allocation2 + $0x1c0] sm:$0xff]
        %v1496 = vld [vmem:[#allocation2 + $0x1c8] sm:$0xff]
        %v1497 = vld [vmem:[#allocation2 + $0x1d0] sm:$0xff]
        %v1498 = vld [vmem:[#allocation2 + $0x1d8] sm:$0xff]
        %v1499 = vld [vmem:[#allocation2 + $0x1e0] sm:$0xff]
        %v1500 = vld [vmem:[#allocation2 + $0x1e8] sm:$0xff]
        %v1501 = vld [vmem:[#allocation2 + $0x1f0] sm:$0xff]
        %v1502 = vld [vmem:[#allocation2 + $0x1f8] sm:$0xff]
        %1503 = vmatprep.subr.mxu0 %v1470
        %1504 = vmatpush1.msra.mxu0 %v1469
        %1505 = vmatprep.subr.mxu0 %v1468
        %1506 = vmatpush1.msra.mxu0 %v1467
        %1507 = vmatprep.subr.mxu0 %v1466
        %1508 = vmatpush1.msra.mxu0 %v1465
        %1509 = vmatprep.subr.mxu0 %v1464
        %1510 = vmatpush1.msra.mxu0 %v1463
        %1511 = vmatprep.subr.mxu0 %v1462
        %1512 = vmatpush1.msra.mxu0 %v1461
        %1513 = vmatprep.subr.mxu0 %v1460
        %1514 = vmatpush1.msra.mxu0 %v1459
        %1515 = vmatprep.subr.mxu0 %v1458
        %1516 = vmatpush1.msra.mxu0 %v1457
        %1517 = vmatprep.subr.mxu0 %v1456
        %1518 = vmatpush1.msra.mxu0 %v1455
        %1519 = vmatprep.subr.mxu0 %v1454
        %1520 = vmatpush1.msra.mxu0 %v1453
        %1521 = vmatprep.subr.mxu0 %v1452
        %1522 = vmatpush1.msra.mxu0 %v1451
        %1523 = vmatprep.subr.mxu0 %v1450
        %1524 = vmatpush1.msra.mxu0 %v1449
        %1525 = vmatprep.subr.mxu0 %v1448
        %1526 = vmatpush1.msra.mxu0 %v1447
        %1527 = vmatprep.subr.mxu0 %v1446
        %1528 = vmatpush1.msra.mxu0 %v1445
        %1529 = vmatprep.subr.mxu0 %v1444
        %1530 = vmatpush1.msra.mxu0 %v1443
        %1531 = vmatprep.subr.mxu0 %v1442
        %1532 = vmatpush1.msra.mxu0 %v1441
        %1533 = vmatprep.subr.mxu0 %v1440
        %1534 = vmatpush1.msra.mxu0 %v1439
        %1535 = vmatprep.subr.mxu0 %v1502
        %1536 = vmatpush2.msra.mxu0 %v1501
        %1537 = vmatprep.subr.mxu0 %v1500
        %1538 = vmatpush2.msra.mxu0 %v1499
        %1539 = vmatprep.subr.mxu0 %v1498
        %1540 = vmatpush2.msra.mxu0 %v1497
        %1541 = vmatprep.subr.mxu0 %v1496
        %1542 = vmatpush2.msra.mxu0 %v1495
        %1543 = vmatprep.subr.mxu0 %v1494
        %1544 = vmatpush2.msra.mxu0 %v1493
        %1545 = vmatprep.subr.mxu0 %v1492
        %1546 = vmatpush2.msra.mxu0 %v1491
        %1547 = vmatprep.subr.mxu0 %v1490
        %1548 = vmatpush2.msra.mxu0 %v1489
        %1549 = vmatprep.subr.mxu0 %v1488
        %1550 = vmatpush2.msra.mxu0 %v1487
        %1551 = vmatprep.subr.mxu0 %v1486
        %1552 = vmatpush2.msra.mxu0 %v1485
        %1553 = vmatprep.subr.mxu0 %v1484
        %1554 = vmatpush2.msra.mxu0 %v1483
        %1555 = vmatprep.subr.mxu0 %v1482
        %1556 = vmatpush2.msra.mxu0 %v1481
        %1557 = vmatprep.subr.mxu0 %v1480
        %1558 = vmatpush2.msra.mxu0 %v1479
        %1559 = vmatprep.subr.mxu0 %v1478
        %1560 = vmatpush2.msra.mxu0 %v1477
        %1561 = vmatprep.subr.mxu0 %v1476
        %1562 = vmatpush2.msra.mxu0 %v1475
        %1563 = vmatprep.subr.mxu0 %v1474
        %1564 = vmatpush2.msra.mxu0 %v1473
        %1565 = vmatprep.subr.mxu0 %v1472
        %1566 = vmatpush2.msra.mxu0 %v1471
        %1567 = vmatprep.mubr.f32.mxu0 %v248
        %1568 = vmatmul.mubr.f32.gmra.mxu0 %v247
        %v1569 = vpop.f32.mrf.mxu0
        %v1570 = vadd.f32 0.0, %v1569
        %v1571 = vpop.f32.mrf.mxu0
        %v1572 = vadd.f32 0.0, %v1571
        %1573 = vmatprep.mubr.f32.mxu0 %v250
        %1574 = vmatmul.mubr.f32.gmra.mxu0 %v249
        %v1575 = vpop.f32.mrf.mxu0
        %v1576 = vadd.f32 0.0, %v1575
        %v1577 = vpop.f32.mrf.mxu0
        %v1578 = vadd.f32 0.0, %v1577
        %1579 = vmatprep.mubr.f32.mxu0 %v252
        %1580 = vmatmul.mubr.f32.gmra.mxu0 %v251
        %v1581 = vpop.f32.mrf.mxu0
        %v1582 = vadd.f32 0.0, %v1581
        %v1583 = vpop.f32.mrf.mxu0
        %v1584 = vadd.f32 0.0, %v1583
        %1585 = vmatprep.mubr.f32.mxu0 %v254
        %1586 = vmatmul.mubr.f32.gmra.mxu0 %v253
        %v1587 = vpop.f32.mrf.mxu0
        %v1588 = vadd.f32 0.0, %v1587
        %v1589 = vpop.f32.mrf.mxu0
        %v1590 = vadd.f32 0.0, %v1589
        %1591 = vmatprep.mubr.f32.mxu0 %v256
        %1592 = vmatmul.mubr.f32.gmra.mxu0 %v255
        %v1593 = vpop.f32.mrf.mxu0
        %v1594 = vadd.f32 0.0, %v1593
        %v1595 = vpop.f32.mrf.mxu0
        %v1596 = vadd.f32 0.0, %v1595
        %1597 = vmatprep.mubr.f32.mxu0 %v258
        %1598 = vmatmul.mubr.f32.gmra.mxu0 %v257
        %v1599 = vpop.f32.mrf.mxu0
        %v1600 = vadd.f32 0.0, %v1599
        %v1601 = vpop.f32.mrf.mxu0
        %v1602 = vadd.f32 0.0, %v1601
        %1603 = vmatprep.mubr.f32.mxu0 %v260
        %1604 = vmatmul.mubr.f32.gmra.mxu0 %v259
        %v1605 = vpop.f32.mrf.mxu0
        %v1606 = vadd.f32 0.0, %v1605
        %v1607 = vpop.f32.mrf.mxu0
        %v1608 = vadd.f32 0.0, %v1607
        %1609 = vmatprep.mubr.f32.mxu0 %v262
        %1610 = vmatmul.mubr.f32.gmra.mxu0 %v261
        %v1611 = vpop.f32.mrf.mxu0
        %v1612 = vadd.f32 0.0, %v1611
        %v1613 = vpop.f32.mrf.mxu0
        %v1614 = vadd.f32 0.0, %v1613
        %1615 = vmatprep.mubr.f32.mxu0 %v264
        %1616 = vmatmul.mubr.f32.gmra.mxu0 %v263
        %v1617 = vpop.f32.mrf.mxu0
        %v1618 = vadd.f32 0.0, %v1617
        %v1619 = vpop.f32.mrf.mxu0
        %v1620 = vadd.f32 0.0, %v1619
        %1621 = vmatprep.mubr.f32.mxu0 %v266
        %1622 = vmatmul.mubr.f32.gmra.mxu0 %v265
        %v1623 = vpop.f32.mrf.mxu0
        %v1624 = vadd.f32 0.0, %v1623
        %v1625 = vpop.f32.mrf.mxu0
        %v1626 = vadd.f32 0.0, %v1625
        %1627 = vmatprep.mubr.f32.mxu0 %v268
        %1628 = vmatmul.mubr.f32.gmra.mxu0 %v267
        %v1629 = vpop.f32.mrf.mxu0
        %v1630 = vadd.f32 0.0, %v1629
        %v1631 = vpop.f32.mrf.mxu0
        %v1632 = vadd.f32 0.0, %v1631
        %1633 = vmatprep.mubr.f32.mxu0 %v270
        %1634 = vmatmul.mubr.f32.gmra.mxu0 %v269
        %v1635 = vpop.f32.mrf.mxu0
        %v1636 = vadd.f32 0.0, %v1635
        %v1637 = vpop.f32.mrf.mxu0
        %v1638 = vadd.f32 0.0, %v1637
        %1639 = vmatprep.mubr.f32.mxu0 %v272
        %1640 = vmatmul.mubr.f32.gmra.mxu0 %v271
        %v1641 = vpop.f32.mrf.mxu0
        %v1642 = vadd.f32 0.0, %v1641
        %v1643 = vpop.f32.mrf.mxu0
        %v1644 = vadd.f32 0.0, %v1643
        %1645 = vmatprep.mubr.f32.mxu0 %v274
        %1646 = vmatmul.mubr.f32.gmra.mxu0 %v273
        %v1647 = vpop.f32.mrf.mxu0
        %v1648 = vadd.f32 0.0, %v1647
        %v1649 = vpop.f32.mrf.mxu0
        %v1650 = vadd.f32 0.0, %v1649
        %1651 = vmatprep.mubr.f32.mxu0 %v276
        %1652 = vmatmul.mubr.f32.gmra.mxu0 %v275
        %v1653 = vpop.f32.mrf.mxu0
        %v1654 = vadd.f32 0.0, %v1653
        %v1655 = vpop.f32.mrf.mxu0
        %v1656 = vadd.f32 0.0, %v1655
        %1657 = vmatprep.mubr.f32.mxu0 %v278
        %1658 = vmatmul.mubr.f32.gmra.mxu0 %v277
        %v1659 = vpop.f32.mrf.mxu0
        %v1660 = vadd.f32 0.0, %v1659
        %v1661 = vpop.f32.mrf.mxu0
        %v1662 = vadd.f32 0.0, %v1661
        %1663 = vmatprep.mubr.f32.mxu0 %v280
        %1664 = vmatmul.mubr.f32.gmra.mxu0 %v279
        %v1665 = vpop.f32.mrf.mxu0
        %v1666 = vadd.f32 0.0, %v1665
        %v1667 = vpop.f32.mrf.mxu0
        %v1668 = vadd.f32 0.0, %v1667
        %1669 = vmatprep.mubr.f32.mxu0 %v282
        %1670 = vmatmul.mubr.f32.gmra.mxu0 %v281
        %v1671 = vpop.f32.mrf.mxu0
        %v1672 = vadd.f32 0.0, %v1671
        %v1673 = vpop.f32.mrf.mxu0
        %v1674 = vadd.f32 0.0, %v1673
        %1675 = vmatprep.mubr.f32.mxu0 %v284
        %1676 = vmatmul.mubr.f32.gmra.mxu0 %v283
        %v1677 = vpop.f32.mrf.mxu0
        %v1678 = vadd.f32 0.0, %v1677
        %v1679 = vpop.f32.mrf.mxu0
        %v1680 = vadd.f32 0.0, %v1679
        %1681 = vmatprep.mubr.f32.mxu0 %v286
        %1682 = vmatmul.mubr.f32.gmra.mxu0 %v285
        %v1683 = vpop.f32.mrf.mxu0
        %v1684 = vadd.f32 0.0, %v1683
        %v1685 = vpop.f32.mrf.mxu0
        %v1686 = vadd.f32 0.0, %v1685
        %1687 = vmatprep.mubr.f32.mxu0 %v288
        %1688 = vmatmul.mubr.f32.gmra.mxu0 %v287
        %v1689 = vpop.f32.mrf.mxu0
        %v1690 = vadd.f32 0.0, %v1689
        %v1691 = vpop.f32.mrf.mxu0
        %v1692 = vadd.f32 0.0, %v1691
        %1693 = vmatprep.mubr.f32.mxu0 %v290
        %1694 = vmatmul.mubr.f32.gmra.mxu0 %v289
        %v1695 = vpop.f32.mrf.mxu0
        %v1696 = vadd.f32 0.0, %v1695
        %v1697 = vpop.f32.mrf.mxu0
        %v1698 = vadd.f32 0.0, %v1697
        %1699 = vmatprep.mubr.f32.mxu0 %v292
        %1700 = vmatmul.mubr.f32.gmra.mxu0 %v291
        %v1701 = vpop.f32.mrf.mxu0
        %v1702 = vadd.f32 0.0, %v1701
        %v1703 = vpop.f32.mrf.mxu0
        %v1704 = vadd.f32 0.0, %v1703
        %1705 = vmatprep.mubr.f32.mxu0 %v294
        %1706 = vmatmul.mubr.f32.gmra.mxu0 %v293
        %v1707 = vpop.f32.mrf.mxu0
        %v1708 = vadd.f32 0.0, %v1707
        %v1709 = vpop.f32.mrf.mxu0
        %v1710 = vadd.f32 0.0, %v1709
        %1711 = vmatprep.mubr.f32.mxu0 %v296
        %1712 = vmatmul.mubr.f32.gmra.mxu0 %v295
        %v1713 = vpop.f32.mrf.mxu0
        %v1714 = vadd.f32 0.0, %v1713
        %v1715 = vpop.f32.mrf.mxu0
        %v1716 = vadd.f32 0.0, %v1715
        %1717 = vmatprep.mubr.f32.mxu0 %v298
        %1718 = vmatmul.mubr.f32.gmra.mxu0 %v297
        %v1719 = vpop.f32.mrf.mxu0
        %v1720 = vadd.f32 0.0, %v1719
        %v1721 = vpop.f32.mrf.mxu0
        %v1722 = vadd.f32 0.0, %v1721
        %1723 = vmatprep.mubr.f32.mxu0 %v300
        %1724 = vmatmul.mubr.f32.gmra.mxu0 %v299
        %v1725 = vpop.f32.mrf.mxu0
        %v1726 = vadd.f32 0.0, %v1725
        %v1727 = vpop.f32.mrf.mxu0
        %v1728 = vadd.f32 0.0, %v1727
        %1729 = vmatprep.mubr.f32.mxu0 %v302
        %1730 = vmatmul.mubr.f32.gmra.mxu0 %v301
        %v1731 = vpop.f32.mrf.mxu0
        %v1732 = vadd.f32 0.0, %v1731
        %v1733 = vpop.f32.mrf.mxu0
        %v1734 = vadd.f32 0.0, %v1733
        %1735 = vmatprep.mubr.f32.mxu0 %v304
        %1736 = vmatmul.mubr.f32.gmra.mxu0 %v303
        %v1737 = vpop.f32.mrf.mxu0
        %v1738 = vadd.f32 0.0, %v1737
        %v1739 = vpop.f32.mrf.mxu0
        %v1740 = vadd.f32 0.0, %v1739
        %1741 = vmatprep.mubr.f32.mxu0 %v306
        %1742 = vmatmul.mubr.f32.gmra.mxu0 %v305
        %v1743 = vpop.f32.mrf.mxu0
        %v1744 = vadd.f32 0.0, %v1743
        %v1745 = vpop.f32.mrf.mxu0
        %v1746 = vadd.f32 0.0, %v1745
        %1747 = vmatprep.mubr.f32.mxu0 %v308
        %1748 = vmatmul.mubr.f32.gmra.mxu0 %v307
        %v1749 = vpop.f32.mrf.mxu0
        %v1750 = vadd.f32 0.0, %v1749
        %v1751 = vpop.f32.mrf.mxu0
        %v1752 = vadd.f32 0.0, %v1751
        %1753 = vmatprep.mubr.f32.mxu0 %v310
        %1754 = vmatmul.mubr.f32.gmra.mxu0 %v309
        %v1755 = vpop.f32.mrf.mxu0
        %v1756 = vadd.f32 0.0, %v1755
        %v1757 = vpop.f32.mrf.mxu0
        %v1758 = vadd.f32 0.0, %v1757
        %1759 = vdwg.mxu0
        %v1760 = vmul.f32 %v1439, 2.0
        %v1761 = vmul.f32 %v1441, 2.0
        %v1762 = vmul.f32 %v1443, 2.0
        %v1763 = vmul.f32 %v1445, 2.0
        %v1764 = vmul.f32 %v1447, 2.0
        %v1765 = vmul.f32 %v1449, 2.0
        %v1766 = vmul.f32 %v1451, 2.0
        %v1767 = vmul.f32 %v1453, 2.0
        %v1768 = vmul.f32 %v1455, 2.0
        %v1769 = vmul.f32 %v1457, 2.0
        %v1770 = vmul.f32 %v1459, 2.0
        %v1771 = vmul.f32 %v1461, 2.0
        %v1772 = vmul.f32 %v1463, 2.0
        %v1773 = vmul.f32 %v1465, 2.0
        %v1774 = vmul.f32 %v1467, 2.0
        %v1775 = vmul.f32 %v1469, 2.0
        %v1776 = vmul.f32 %v1471, 2.0
        %v1777 = vmul.f32 %v1473, 2.0
        %v1778 = vmul.f32 %v1475, 2.0
        %v1779 = vmul.f32 %v1477, 2.0
        %v1780 = vmul.f32 %v1479, 2.0
        %v1781 = vmul.f32 %v1481, 2.0
        %v1782 = vmul.f32 %v1483, 2.0
        %v1783 = vmul.f32 %v1485, 2.0
        %v1784 = vmul.f32 %v1487, 2.0
        %v1785 = vmul.f32 %v1489, 2.0
        %v1786 = vmul.f32 %v1491, 2.0
        %v1787 = vmul.f32 %v1493, 2.0
        %v1788 = vmul.f32 %v1495, 2.0
        %v1789 = vmul.f32 %v1497, 2.0
        %v1790 = vmul.f32 %v1499, 2.0
        %v1791 = vmul.f32 %v1501, 2.0
        %v1792 = vsub.f32 %v1760, %v1570
        %v1793 = vsub.f32 %v1761, %v1576
        %v1794 = vsub.f32 %v1762, %v1582
        %v1795 = vsub.f32 %v1763, %v1588
        %v1796 = vsub.f32 %v1764, %v1594
        %v1797 = vsub.f32 %v1765, %v1600
        %v1798 = vsub.f32 %v1766, %v1606
        %v1799 = vsub.f32 %v1767, %v1612
        %v1800 = vsub.f32 %v1768, %v1618
        %v1801 = vsub.f32 %v1769, %v1624
        %v1802 = vsub.f32 %v1770, %v1630
        %v1803 = vsub.f32 %v1771, %v1636
        %v1804 = vsub.f32 %v1772, %v1642
        %v1805 = vsub.f32 %v1773, %v1648
        %v1806 = vsub.f32 %v1774, %v1654
        %v1807 = vsub.f32 %v1775, %v1660
        %v1808 = vsub.f32 %v1776, %v1666
        %v1809 = vsub.f32 %v1777, %v1672
        %v1810 = vsub.f32 %v1778, %v1678
        %v1811 = vsub.f32 %v1779, %v1684
        %v1812 = vsub.f32 %v1780, %v1690
        %v1813 = vsub.f32 %v1781, %v1696
        %v1814 = vsub.f32 %v1782, %v1702
        %v1815 = vsub.f32 %v1783, %v1708
        %v1816 = vsub.f32 %v1784, %v1714
        %v1817 = vsub.f32 %v1785, %v1720
        %v1818 = vsub.f32 %v1786, %v1726
        %v1819 = vsub.f32 %v1787, %v1732
        %v1820 = vsub.f32 %v1788, %v1738
        %v1821 = vsub.f32 %v1789, %v1744
        %v1822 = vsub.f32 %v1790, %v1750
        %v1823 = vsub.f32 %v1791, %v1756
        %s1824 = sld [smem:[#allocation3]]
        %v1825 = vstv %s1824
        %v1826 = vmul.f32 %v1825, %v1792
        %v1827 = vmul.f32 %v1825, %v1793
        %v1828 = vmul.f32 %v1825, %v1794
        %v1829 = vmul.f32 %v1825, %v1795
        %v1830 = vmul.f32 %v1825, %v1796
        %v1831 = vmul.f32 %v1825, %v1797
        %v1832 = vmul.f32 %v1825, %v1798
        %v1833 = vmul.f32 %v1825, %v1799
        %v1834 = vmul.f32 %v1825, %v1800
        %v1835 = vmul.f32 %v1825, %v1801
        %v1836 = vmul.f32 %v1825, %v1802
        %v1837 = vmul.f32 %v1825, %v1803
        %v1838 = vmul.f32 %v1825, %v1804
        %v1839 = vmul.f32 %v1825, %v1805
        %v1840 = vmul.f32 %v1825, %v1806
        %v1841 = vmul.f32 %v1825, %v1807
        %v1842 = vmul.f32 %v1825, %v1808
        %v1843 = vmul.f32 %v1825, %v1809
        %v1844 = vmul.f32 %v1825, %v1810
        %v1845 = vmul.f32 %v1825, %v1811
        %v1846 = vmul.f32 %v1825, %v1812
        %v1847 = vmul.f32 %v1825, %v1813
        %v1848 = vmul.f32 %v1825, %v1814
        %v1849 = vmul.f32 %v1825, %v1815
        %v1850 = vmul.f32 %v1825, %v1816
        %v1851 = vmul.f32 %v1825, %v1817
        %v1852 = vmul.f32 %v1825, %v1818
        %v1853 = vmul.f32 %v1825, %v1819
        %v1854 = vmul.f32 %v1825, %v1820
        %v1855 = vmul.f32 %v1825, %v1821
        %v1856 = vmul.f32 %v1825, %v1822
        %v1857 = vmul.f32 %v1825, %v1823
        %v1858 = vadd.f32 %v1572, %v1826
        %v1859 = vadd.f32 %v1578, %v1827
        %v1860 = vadd.f32 %v1584, %v1828
        %v1861 = vadd.f32 %v1590, %v1829
        %v1862 = vadd.f32 %v1596, %v1830
        %v1863 = vadd.f32 %v1602, %v1831
        %v1864 = vadd.f32 %v1608, %v1832
        %v1865 = vadd.f32 %v1614, %v1833
        %v1866 = vadd.f32 %v1620, %v1834
        %v1867 = vadd.f32 %v1626, %v1835
        %v1868 = vadd.f32 %v1632, %v1836
        %v1869 = vadd.f32 %v1638, %v1837
        %v1870 = vadd.f32 %v1644, %v1838
        %v1871 = vadd.f32 %v1650, %v1839
        %v1872 = vadd.f32 %v1656, %v1840
        %v1873 = vadd.f32 %v1662, %v1841
        %v1874 = vadd.f32 %v1668, %v1842
        %v1875 = vadd.f32 %v1674, %v1843
        %v1876 = vadd.f32 %v1680, %v1844
        %v1877 = vadd.f32 %v1686, %v1845
        %v1878 = vadd.f32 %v1692, %v1846
        %v1879 = vadd.f32 %v1698, %v1847
        %v1880 = vadd.f32 %v1704, %v1848
        %v1881 = vadd.f32 %v1710, %v1849
        %v1882 = vadd.f32 %v1716, %v1850
        %v1883 = vadd.f32 %v1722, %v1851
        %v1884 = vadd.f32 %v1728, %v1852
        %v1885 = vadd.f32 %v1734, %v1853
        %v1886 = vadd.f32 %v1740, %v1854
        %v1887 = vadd.f32 %v1746, %v1855
        %v1888 = vadd.f32 %v1752, %v1856
        %v1889 = vadd.f32 %v1758, %v1857
        %1890 = vst [vmem:[%s214] sm:$0xff] %v1858
        %1891 = vst [vmem:[%s214 + $0x8] sm:$0xff] %v1859
        %1892 = vst [vmem:[%s214 + $0x10] sm:$0xff] %v1860
        %1893 = vst [vmem:[%s214 + $0x18] sm:$0xff] %v1861
        %1894 = vst [vmem:[%s214 + $0x20] sm:$0xff] %v1862
        %1895 = vst [vmem:[%s214 + $0x28] sm:$0xff] %v1863
        %1896 = vst [vmem:[%s214 + $0x30] sm:$0xff] %v1864
        %1897 = vst [vmem:[%s214 + $0x38] sm:$0xff] %v1865
        %1898 = vst [vmem:[%s214 + $0x40] sm:$0xff] %v1866
        %1899 = vst [vmem:[%s214 + $0x48] sm:$0xff] %v1867
        %1900 = vst [vmem:[%s214 + $0x50] sm:$0xff] %v1868
        %1901 = vst [vmem:[%s214 + $0x58] sm:$0xff] %v1869
        %1902 = vst [vmem:[%s214 + $0x60] sm:$0xff] %v1870
        %1903 = vst [vmem:[%s214 + $0x68] sm:$0xff] %v1871
        %1904 = vst [vmem:[%s214 + $0x70] sm:$0xff] %v1872
        %1905 = vst [vmem:[%s214 + $0x78] sm:$0xff] %v1873
        %1906 = vst [vmem:[%s214 + $0x80] sm:$0xff] %v1874
        %1907 = vst [vmem:[%s214 + $0x88] sm:$0xff] %v1875
        %1908 = vst [vmem:[%s214 + $0x90] sm:$0xff] %v1876
        %1909 = vst [vmem:[%s214 + $0x98] sm:$0xff] %v1877
        %1910 = vst [vmem:[%s214 + $0xa0] sm:$0xff] %v1878
        %1911 = vst [vmem:[%s214 + $0xa8] sm:$0xff] %v1879
        %1912 = vst [vmem:[%s214 + $0xb0] sm:$0xff] %v1880
        %1913 = vst [vmem:[%s214 + $0xb8] sm:$0xff] %v1881
        %1914 = vst [vmem:[%s214 + $0xc0] sm:$0xff] %v1882
        %1915 = vst [vmem:[%s214 + $0xc8] sm:$0xff] %v1883
        %1916 = vst [vmem:[%s214 + $0xd0] sm:$0xff] %v1884
        %1917 = vst [vmem:[%s214 + $0xd8] sm:$0xff] %v1885
        %1918 = vst [vmem:[%s214 + $0xe0] sm:$0xff] %v1886
        %1919 = vst [vmem:[%s214 + $0xe8] sm:$0xff] %v1887
        %1920 = vst [vmem:[%s214 + $0xf0] sm:$0xff] %v1888
        %1921 = vst [vmem:[%s214 + $0xf8] sm:$0xff] %v1889
        %s1922 = sand.u32 %s98, 1
        %s1923 = scalar_lea.sflag [#allocation5], %s1922
        %s1924 = sand.u32 %s98, 1
        %s1925 = smul.addr %s1924, 256
        %s1926 = scalar_lea.vmem [#allocation10], %s1925
        // Predicated region
        $region45: #{tpu_custom_call.1} parent=31 // pred_check
          %p1927 = pneg %p108
        $region46: #{tpu_custom_call.1} parent=31 // pred_check_branch
          %1929 = sbr.rel (%p1927) target = $region48
        $region47: #{tpu_custom_call.1} parent=31 // pred_region
          %s1931 = ssub.s32 4096, 4096
          %1932 = vsyncadd %s1923, %s1931
          %s1933 = smul.addr %s22, 128
          %s1934 = scalar_lea.hbm %s3, %s1933
          %s1935 = sshll.u32 %s1926, 4
          %s1936 = int_to_ptr.vmem [resolvable:$true] %s1935
          %1941 = dma.vmem_to_hbm [thread:$0]  %s1936, 4096, %s1934, %s1923, 128, 256, 8
        $region48: #{tpu_custom_call.1} parent=31 // pred_fallthru
          _
      $region32: #{tpu_custom_call.1} parent=5 // pred_fallthru
        _
      %p1942 = scmp.le.s32.totalorder 2, %s17
      // Predicated region
      $region49: #{tpu_custom_call.1} parent=5 // pred_check
        %p1943 = pneg %p1942
      $region50: #{tpu_custom_call.1} parent=5 // pred_check_branch
        %1945 = sbr.rel (%p1943) target = $region52
      $region51: #{tpu_custom_call.1} parent=5 // pred_region
        %s1946 = ssub.s32 %s17, 2
        // Predicated region
        $region53: #{tpu_custom_call.1} parent=51 // pred_check
          %p1947 = pneg %p114
        $region54: #{tpu_custom_call.1} parent=51 // pred_check_branch
          %1949 = sbr.rel (%p1947) target = $region56
        $region55: #{tpu_custom_call.1} parent=51 // pred_region
          %s1950 = sand.u32 %s99, 1
          %s1951 = scalar_lea.sflag [#allocation5], %s1950
          %s1952 = sand.u32 %s99, 1
          %s1953 = smul.addr %s1952, 256
          %s1954 = scalar_lea.vmem [#allocation10], %s1953
          %1955 = dma.done %s1951, 4096
        $region56: #{tpu_custom_call.1} parent=51 // pred_fallthru
          _
      $region52: #{tpu_custom_call.1} parent=5 // pred_fallthru
        _
    $region6: #{tpu_custom_call.1} parent=1 // loop_footer
      %s21 = sadd.s32 1, %s17
    $region7: #{tpu_custom_call.1} parent=1 // loop_footer_branch
      %16 = sbr.rel target = $region3
    $region8: #{tpu_custom_call.1} parent=1 // loop_exit
      _
    %1956 = vsyncpa [#allocation4], 1
    %s1957 = scalar_lea.sflag [#allocation4], 1
    %1958 = vsyncpa %s1957, 1
    %1959 = vsyncpa [#allocation9], 1
    %s1960 = scalar_lea.sflag [#allocation9], 1
    %1961 = vsyncpa %s1960, 1
    %1962 = vsyncpa [#allocation5], 1
    %s1963 = scalar_lea.sflag [#allocation5], 1
    %1964 = vsyncpa %s1963, 1
    %1965 = vsyncpa [#allocation6], 1
    %s1966 = scalar_lea.sflag [#allocation6], 1
    %1967 = vsyncpa %s1966, 1

</llo_original>
